<compile_context>
chip_gen: v7x
topology: tpu7x:2x2x1
jax: 0.10.0
libtpu: 0.0.40
codegen_flags: <defaults>
</compile_context>

<pallas_src>
import numpy as np
import jax
import jax.numpy as jnp
from jax import lax
from jax.experimental import pallas as pl
from jax.experimental.pallas import tpu as pltpu

EPS = 1e-7  # matches torch.clamp(..., min=1e-07) in the reference stft()


def _round_up(v, m):
    return (v + m - 1) // m * m


def _round_down(v, m):
    return (v // m) * m


def _cdiv(a, b):
    return -(-a // b)


# ---------------------------------------------------------------------------
# Generation-aware VMEM budgets (v5e/v6e: 128 MiB physical; v7x: 64 MiB).
# ---------------------------------------------------------------------------
def _vmem_budgets():
    try:
        cap = int(pltpu.get_tpu_info().vmem_capacity_bytes)
    except Exception:
        cap = 64 << 20  # conservative (v7x-sized) fallback
    if cap >= (100 << 20):                    # v5e / v6e
        return dict(vmem_limit=96 << 20, weight_budget=40 << 20)
    return dict(vmem_limit=40 << 20, weight_budget=12 << 20)   # v7x


# ---------------------------------------------------------------------------
# Pallas kernel (built per resolution; all tile params are static Python ints).
# ---------------------------------------------------------------------------
def _make_stft_loss_kernel(tile_m, tile_k, k_valid, bf_valid, tiles_per_ch):
    row_padded = tiles_per_ch * tile_m > bf_valid

    def kernel(x_ref, y_ref, w_ref, out_ref):
        # x_ref/y_ref: (tile_m, N) bf16 frames; w_ref: (N, 2*tile_k) bf16
        #   cols [0:tile_k) = win*cos, [tile_k:) = -win*sin
        # out_ref: (8, 128) f32, resident across kt; lane0=sc_num, lane1=sc_den,
        #   lane2=mag_sum (accumulated over frequency tiles).
        kt = pl.program_id(1)

        @pl.when(kt == 0)
        def _():
            out_ref[...] = jnp.zeros_like(out_ref)

        w = w_ref[...]
        xres = jnp.dot(x_ref[...], w, preferred_element_type=jnp.float32)
        yres = jnp.dot(y_ref[...], w, preferred_element_type=jnp.float32)
        xr, xi = xres[:, :tile_k], xres[:, tile_k:]
        yr, yi = yres[:, :tile_k], yres[:, tile_k:]

        # Clamped power spectra (padded rows / bins land exactly on EPS).
        x2 = jnp.maximum(xr * xr + xi * xi, EPS)
        y2 = jnp.maximum(yr * yr + yi * yi, EPS)

        # SC numerator ||y_mag - x_mag||^2 with a single sqrt per element:
        # (sqrt(y2)-sqrt(x2))^2 = x2 + y2 - 2*sqrt(x2*y2); clamp guards
        # cancellation when |X|~|Y|.  Padding contributes exactly 0.
        sc_num = jnp.sum(jnp.maximum(x2 + y2 - 2.0 * jnp.sqrt(x2 * y2), 0.0))

        # Log-magnitude L1 sum: |log y_mag - log x_mag| = 0.5*|log y2 - log x2|
        # (padding contributes exactly 0).
        mag_sum = 0.5 * jnp.sum(jnp.abs(jnp.log(y2) - jnp.log(x2)))

        # SC denominator ||y_mag||^2: mask padded rows / bins (each would
        # otherwise add exactly EPS).
        col_ok = (kt * tile_k
                  + lax.broadcasted_iota(jnp.int32, (1, tile_k), 1)) < k_valid
        if row_padded:
            if tiles_per_ch > 1:
                row0 = (pl.program_id(0) % tiles_per_ch) * tile_m
            else:
                row0 = 0
            row_ok = (row0 + lax.broadcasted_iota(jnp.int32, (tile_m, 1), 0)) < bf_valid
            mask = jnp.logical_and(row_ok, col_ok)
        else:
            mask = col_ok
        sc_den = jnp.sum(jnp.where(mask, y2, 0.0))

        # Accumulate the three partials into one lane-dense (8,128) block.
        lane = lax.broadcasted_iota(jnp.int32, (8, 128), 1)
        out_ref[...] += jnp.where(lane == 0, sc_num,
                          jnp.where(lane == 1, sc_den,
                            jnp.where(lane == 2, mag_sum, 0.0)))

    return kernel


# ---------------------------------------------------------------------------
# Host-side deterministic setup (windows, fused DFT matrices, per-res plans).
# ---------------------------------------------------------------------------
def make_window(name, length):
    """torch-style windows with periodic=True (the torch default)."""
    n = np.arange(length, dtype=np.float64)
    if name == 'hann_window':
        w = 0.5 - 0.5 * np.cos(2.0 * np.pi * n / length)
    elif name == 'hamming_window':
        w = 0.54 - 0.46 * np.cos(2.0 * np.pi * n / length)
    elif name == 'blackman_window':
        w = (0.42 - 0.5 * np.cos(2.0 * np.pi * n / length)
             + 0.08 * np.cos(4.0 * np.pi * n / length))
    elif name == 'bartlett_window':
        w = 1.0 - np.abs(2.0 * n / length - 1.0)
    elif name == 'kaiser_window':
        beta = 12.0  # torch default
        arg = np.maximum(1.0 - (2.0 * n / length - 1.0) ** 2, 0.0)
        w = np.i0(beta * np.sqrt(arg)) / np.i0(beta)
    else:
        raise ValueError(f"unknown window {name}")
    return w.astype(np.float64)


def fused_dft_weights(n_fft, win_length, window, tile_k, n_k_tiles):
    """(N, n_k_tiles*2*tile_k) matrix: per frequency tile, [win*cos | -win*sin],
    zero-padded to tile_k columns each (centered window folded in, torch.stft style)."""
    K = n_fft // 2 + 1
    win_pad = np.zeros(n_fft, dtype=np.float64)
    lp = (n_fft - win_length) // 2
    win_pad[lp:lp + win_length] = window
    n = np.arange(n_fft, dtype=np.float64)[:, None]
    k = np.arange(K, dtype=np.float64)[None, :]
    ang = 2.0 * np.pi * n * k / n_fft
    wr = win_pad[:, None] * np.cos(ang)
    wi = -win_pad[:, None] * np.sin(ang)
    kp = n_k_tiles * tile_k
    wr_p = np.zeros((n_fft, kp), dtype=np.float64)
    wi_p = np.zeros((n_fft, kp), dtype=np.float64)
    wr_p[:, :K] = wr
    wi_p[:, :K] = wi
    w = np.zeros((n_fft, n_k_tiles * 2 * tile_k), dtype=np.float32)
    for kt in range(n_k_tiles):
        sl = slice(kt * tile_k, (kt + 1) * tile_k)
        w[:, kt * 2 * tile_k:           kt * 2 * tile_k + tile_k] = wr_p[:, sl]
        w[:, kt * 2 * tile_k + tile_k: (kt + 1) * 2 * tile_k] = wi_p[:, sl]
    return w


def plan_resolution(n_fft, hop, win_len, win_name):
    """Static per-resolution plan: frequency tiling, tile_m budget, bf16 weights."""
    K = n_fft // 2 + 1
    K_pad = _round_up(K, 128)
    budgets = _vmem_budgets()
    weight_budget, vmem_limit = budgets['weight_budget'], budgets['vmem_limit']

    # bf16 weight block, double-buffered: 2 * n_fft * (2*tile_k) * 2 B = 8*n_fft*tile_k.
    # Prefer fully-resident weights (constant index_map -> single DMA for the grid).
    if 8 * n_fft * K_pad <= weight_budget:
        tile_k = K_pad
    else:
        tile_k = max(128, _round_down(weight_budget // (8 * n_fft), 128))
    n_k_tiles = _cdiv(K_pad, tile_k)

    # Frames (x & y, bf16, double-buffered): 8 * tile_m * n_fft bytes.
    # f32 epilogue intermediates (two dot results, x2/y2, temps): ~48*tile_m*tile_k.
    weight_bytes = 8 * n_fft * tile_k
    remaining = max(0, vmem_limit - weight_bytes - (4 << 20))
    tile_m_budget = _round_down(remaining // (8 * n_fft + 48 * tile_k), 16)
    tile_m_budget = int(min(max(tile_m_budget, 16), 512))

    w = fused_dft_weights(n_fft, win_len, make_window(win_name, win_len),
                          tile_k, n_k_tiles)
    return dict(n_fft=n_fft, hop=hop, K=K, tile_k=tile_k, n_k_tiles=n_k_tiles,
                tile_m_budget=tile_m_budget, vmem_limit=vmem_limit,
                weights=jnp.asarray(w, dtype=jnp.bfloat16))


def randomize_resolutions(resolutions, min_fft, max_fft, min_hop, max_hop,
                          windows, rng):
    """Deterministic replica of RandomResolutionSTFTLoss.randomize_losses."""
    cfgs = []
    for _ in range(resolutions):
        frame_size = 2 ** rng.randint(int(np.log2(min_fft)), int(np.log2(max_fft)))
        hop_size = max(1, int(frame_size * (min_hop + rng.rand() * (max_hop - min_hop))))
        window_length = int(frame_size * rng.choice([1.0, 0.5, 0.25]))
        window = str(rng.choice(windows))
        cfgs.append((frame_size, hop_size, window_length, window))
    return cfgs


# ---------------------------------------------------------------------------
# Per-resolution STFT loss (all channels in one pallas_call).
# ---------------------------------------------------------------------------
def stft_loss_resolution(x, y, plan):
    """x, y: (B, C, T) float32 -> (sc_loss, mag_loss) summed over channels."""
    B, C, T = x.shape
    n_fft, hop, K = plan['n_fft'], plan['hop'], plan['K']
    tile_k, n_k_tiles = plan['tile_k'], plan['n_k_tiles']
    w = plan['weights']

    # --- framing: torch.stft(center=True, pad_mode='reflect') ----------------
    pad = n_fft // 2
    xc = jnp.transpose(x, (1, 0, 2)).reshape(C * B, T)
    yc = jnp.transpose(y, (1, 0, 2)).reshape(C * B, T)
    xp = jnp.pad(xc, ((0, 0), (pad, pad)), mode='reflect')
    yp = jnp.pad(yc, ((0, 0), (pad, pad)), mode='reflect')
    n_frames = 1 + (T + 2 * pad - n_fft) // hop
    idx = np.arange(n_frames)[:, None] * hop + np.arange(n_fft)[None, :]
    fx = xp[:, idx].reshape(C, B * n_frames, n_fft)   # channel-major rows
    fy = yp[:, idx].reshape(C, B * n_frames, n_fft)

    # --- row tiling (channel-major, padded to a multiple of tile_m) ----------
    bf = B * n_frames
    tile_m = min(plan['tile_m_budget'], _round_up(bf, 16))
    m_pad = _round_up(bf, tile_m)
    if m_pad > bf:
        fx = jnp.pad(fx, ((0, 0), (0, m_pad - bf), (0, 0)))
        fy = jnp.pad(fy, ((0, 0), (0, m_pad - bf), (0, 0)))
    tiles_per_ch = m_pad // tile_m
    n_tiles = C * tiles_per_ch
    # Two separate inputs (no host-side interleave copy), bf16 operands.
    fx = fx.reshape(n_tiles * tile_m, n_fft).astype(jnp.bfloat16)
    fy = fy.reshape(n_tiles * tile_m, n_fft).astype(jnp.bfloat16)

    kernel = _make_stft_loss_kernel(tile_m, tile_k, K, bf, tiles_per_ch)

    flops = 2 * 2 * tile_m * n_fft * (2 * tile_k) * n_tiles * n_k_tiles
    transcendentals = 3 * n_tiles * n_k_tiles * tile_m * tile_k
    w_reads = 1 if n_k_tiles == 1 else n_tiles   # resident vs re-streamed per row tile
    bytes_accessed = (int(fx.size + fy.size) * 2 + int(w.size) * 2 * w_reads
                      + n_tiles * 8 * 128 * 4)

    partials = pl.pallas_call(
        kernel,
        out_shape=jax.ShapeDtypeStruct((n_tiles, 8, 128), jnp.float32),
        grid_spec=pltpu.PrefetchScalarGridSpec(
            num_scalar_prefetch=0,
            grid=(n_tiles, n_k_tiles),
            in_specs=[
                pl.BlockSpec((tile_m, n_fft), lambda t, kt: (t, 0)),
                pl.BlockSpec((tile_m, n_fft), lambda t, kt: (t, 0)),
                pl.BlockSpec((n_fft, 2 * tile_k), lambda t, kt: (0, kt)),
            ],
            out_specs=pl.BlockSpec((None, 8, 128), lambda t, kt: (t, 0, 0)),
        ),
        compiler_params=pltpu.CompilerParams(
            dimension_semantics=("parallel", "arbitrary"),
            vmem_limit_bytes=plan['vmem_limit']),
        cost_estimate=pl.CostEstimate(flops=flops,
                                      transcendentals=transcendentals,
                                      bytes_accessed=bytes_accessed),
    )(fx, fy, w)

    # --- tiny final reduction in JAX (per channel, as in the reference) ------
    p = partials.reshape(C, tiles_per_ch, 8, 128)[:, :, 0, :]
    sc_num_c = jnp.sum(p[..., 0], axis=1)   # (C,)
    sc_den_c = jnp.sum(p[..., 1], axis=1)
    mag_c = jnp.sum(p[..., 2], axis=1)
    sc = jnp.sum(jnp.sqrt(sc_num_c) / jnp.sqrt(sc_den_c))   # sum over channels
    mag = jnp.sum(mag_c) / float(B * n_frames * K)          # sum of per-ch means
    return sc, mag


def build_random_resolution_stft_loss(cfgs, max_fft_size):
    plans = [plan_resolution(*c) for c in cfgs]

    def loss(x, y):
        if x.shape[-1] <= max_fft_size:
            raise ValueError("Input length must be larger than largest FFT size.")
        if y.shape[-1] <= max_fft_size:
            raise ValueError("Target length must be larger than largest FFT size.")
        sc_total = 0.0
        mag_total = 0.0
        for plan in plans:
            sc, mag = stft_loss_resolution(x, y, plan)
            sc_total = sc_total + sc
            mag_total = mag_total + mag
        n = float(len(plans))
        return sc_total / n, mag_total / n

    return jax.jit(loss)


if __name__ == "__main__":
    # Small, deterministic configuration of the module.
    resolutions = 3
    min_fft_size, max_fft_size = 16, 64          # scaled down so T stays small
    min_hop_size, max_hop_size = 0.25, 1.0
    windows = ['hann_window', 'bartlett_window', 'blackman_window',
               'hamming_window', 'kaiser_window']

    # Deterministic stand-in for the module's np.random-based randomization.
    rng = np.random.RandomState(0)
    cfgs = randomize_resolutions(resolutions, min_fft_size, max_fft_size,
                                 min_hop_size, max_hop_size, windows, rng)

    B, C, T = 2, 2, 256  # T must exceed max_fft_size
    key = jax.random.PRNGKey(0)
    kx, ky = jax.random.split(key)
    x = jax.random.normal(kx, (B, C, T), dtype=jnp.float32)
    y = jax.random.normal(ky, (B, C, T), dtype=jnp.float32)

    loss_fn = build_random_resolution_stft_loss(cfgs, max_fft_size)
    sc_loss, mag_loss = loss_fn(x, y)
    jax.block_until_ready((sc_loss, mag_loss))
    assert np.isfinite(float(sc_loss)) and np.isfinite(float(mag_loss))
    print("KERNEL_OK")
</pallas_src>

<mosaic_0001>
module attributes {stable_mosaic.version = 11 : i64} {
  func.func @kernel(%arg0: i32, %arg1: i32, %arg2: memref<48x16xbf16, #tpu.memory_space<vmem>>, %arg3: memref<48x16xbf16, #tpu.memory_space<vmem>>, %arg4: memref<16x256xbf16, #tpu.memory_space<vmem>>, %arg5: memref<1x8x128xf32, #tpu.memory_space<vmem>>) attributes {dimension_semantics = [#tpu.dimension_semantics<parallel>, #tpu.dimension_semantics<arbitrary>], iteration_bounds = array<i64: 2, 1>, scalar_prefetch = 0 : i64, scratch_operands = 0 : i64, tpu.core_type = #tpu.core_type<tc>, window_params = [{transform_indices = @transform_0, window_bounds = array<i64: 48, 16>}, {transform_indices = @transform_1, window_bounds = array<i64: 48, 16>}, {transform_indices = @transform_2, window_bounds = array<i64: 16, 256>}, {transform_indices = @transform_3, window_bounds = array<i64: 1, 8, 128>}]} {
    %c0_i32 = arith.constant 0 : i32
    %0 = arith.cmpi eq, %arg1, %c0_i32 : i32
    %1 = arith.extui %0 : i1 to i32
    %c0_i32_0 = arith.constant 0 : i32
    %2 = arith.cmpi ne, %1, %c0_i32_0 : i32
    scf.if %2 {
      %cst_24 = arith.constant 0.000000e+00 : f32
      %77 = vector.broadcast %cst_24 : f32 to vector<8x128xf32>
      %c0_25 = arith.constant 0 : index
      %c0_26 = arith.constant 0 : index
      %c0_27 = arith.constant 0 : index
      %78 = vector.load %arg5[%c0_25, %c0_26, %c0_27] : memref<1x8x128xf32, #tpu.memory_space<vmem>>, vector<1x8x128xf32>
      %79 = vector.shape_cast %78 : vector<1x8x128xf32> to vector<8x128xf32>
      %80 = vector.shape_cast %77 : vector<8x128xf32> to vector<1x8x128xf32>
      tpu.vector_store %arg5[%c0_25, %c0_26, %c0_27], %80 {strides = array<i32>} : memref<1x8x128xf32, #tpu.memory_space<vmem>>, vector<1x8x128xf32>,
    } else {
    }
    %c0 = arith.constant 0 : index
    %c0_1 = arith.constant 0 : index
    %3 = vector.load %arg4[%c0, %c0_1] : memref<16x256xbf16, #tpu.memory_space<vmem>>, vector<16x256xbf16>
    %c0_2 = arith.constant 0 : index
    %c0_3 = arith.constant 0 : index
    %4 = vector.load %arg2[%c0_2, %c0_3] : memref<48x16xbf16, #tpu.memory_space<vmem>>, vector<48x16xbf16>
    %cst = arith.constant dense<0.000000e+00> : vector<48x256xf32>
    %5 = tpu.matmul %4, %3, %cst {dimension_numbers = #tpu.dot_dimension_numbers<[1], [0], [0], [1], [0, 0, 1, 1], [], []>} : vector<48x16xbf16>, vector<16x256xbf16>, vector<48x256xf32> -> vector<48x256xf32>
    %c0_4 = arith.constant 0 : index
    %c0_5 = arith.constant 0 : index
    %6 = vector.load %arg3[%c0_4, %c0_5] : memref<48x16xbf16, #tpu.memory_space<vmem>>, vector<48x16xbf16>
    %cst_6 = arith.constant dense<0.000000e+00> : vector<48x256xf32>
    %7 = tpu.matmul %6, %3, %cst_6 {dimension_numbers = #tpu.dot_dimension_numbers<[1], [0], [0], [1], [0, 0, 1, 1], [], []>} : vector<48x16xbf16>, vector<16x256xbf16>, vector<48x256xf32> -> vector<48x256xf32>
    %8 = vector.extract_strided_slice %5 {offsets = [0, 0], sizes = [48, 128], strides = [1, 1]} : vector<48x256xf32> to vector<48x128xf32>
    %9 = vector.extract_strided_slice %5 {offsets = [0, 128], sizes = [48, 128], strides = [1, 1]} : vector<48x256xf32> to vector<48x128xf32>
    %10 = vector.extract_strided_slice %7 {offsets = [0, 0], sizes = [48, 128], strides = [1, 1]} : vector<48x256xf32> to vector<48x128xf32>
    %11 = vector.extract_strided_slice %7 {offsets = [0, 128], sizes = [48, 128], strides = [1, 1]} : vector<48x256xf32> to vector<48x128xf32>
    %12 = arith.mulf %8, %8 : vector<48x128xf32>
    %13 = arith.mulf %9, %9 : vector<48x128xf32>
    %14 = arith.addf %12, %13 : vector<48x128xf32>
    %cst_7 = arith.constant 1.000000e-07 : f32
    %15 = vector.broadcast %cst_7 : f32 to vector<48x128xf32>
    %16 = arith.maximumf %14, %15 : vector<48x128xf32>
    %17 = arith.mulf %10, %10 : vector<48x128xf32>
    %18 = arith.mulf %11, %11 : vector<48x128xf32>
    %19 = arith.addf %17, %18 : vector<48x128xf32>
    %cst_8 = arith.constant 1.000000e-07 : f32
    %20 = vector.broadcast %cst_8 : f32 to vector<48x128xf32>
    %21 = arith.maximumf %19, %20 : vector<48x128xf32>
    %22 = arith.addf %16, %21 : vector<48x128xf32>
    %23 = arith.mulf %16, %21 : vector<48x128xf32>
    %24 = math.sqrt %23 : vector<48x128xf32>
    %cst_9 = arith.constant 2.000000e+00 : f32
    %25 = vector.broadcast %cst_9 : f32 to vector<48x128xf32>
    %26 = arith.mulf %25, %24 : vector<48x128xf32>
    %27 = arith.subf %22, %26 : vector<48x128xf32>
    %cst_10 = arith.constant 0.000000e+00 : f32
    %28 = vector.broadcast %cst_10 : f32 to vector<48x128xf32>
    %29 = arith.maximumf %27, %28 : vector<48x128xf32>
    %30 = vector.shape_cast %29 : vector<48x128xf32> to vector<1x48x128xf32>
    %cst_11 = arith.constant dense<0.000000e+00> : vector<1xf32>
    %31 = vector.multi_reduction <add>, %30, %cst_11 [1, 2] : vector<1x48x128xf32> to vector<1xf32>
    %32 = vector.shape_cast %31 : vector<1xf32> to vector<1x1x1xf32>
    %33 = vector.extract %32[0, 0, 0] : f32 from vector<1x1x1xf32>
    %34 = math.log %21 : vector<48x128xf32>
    %35 = math.log %16 : vector<48x128xf32>
    %36 = arith.subf %34, %35 : vector<48x128xf32>
    %37 = math.absf %36 : vector<48x128xf32>
    %38 = vector.shape_cast %37 : vector<48x128xf32> to vector<1x48x128xf32>
    %cst_12 = arith.constant dense<0.000000e+00> : vector<1xf32>
    %39 = vector.multi_reduction <add>, %38, %cst_12 [1, 2] : vector<1x48x128xf32> to vector<1xf32>
    %40 = vector.shape_cast %39 : vector<1xf32> to vector<1x1x1xf32>
    %41 = vector.extract %40[0, 0, 0] : f32 from vector<1x1x1xf32>
    %cst_13 = arith.constant 5.000000e-01 : f32
    %42 = arith.mulf %cst_13, %41 : f32
    %c128_i32 = arith.constant 128 : i32
    %43 = arith.muli %arg1, %c128_i32 : i32
    %44 = tpu.iota {dimensions = array<i32: 1>} : vector<1x128xi32>
    %45 = vector.broadcast %43 : i32 to vector<1x128xi32>
    %46 = arith.addi %45, %44 : vector<1x128xi32>
    %c9_i32 = arith.constant 9 : i32
    %47 = vector.broadcast %c9_i32 : i32 to vector<1x128xi32>
    %48 = arith.cmpi slt, %46, %47 : vector<1x128xi32>
    %cst_14 = arith.constant 0.000000e+00 : f32
    %49 = vector.shape_cast %48 : vector<1x128xi1> to vector<1x128xi1>
    %50 = vector.broadcast %49 : vector<1x128xi1> to vector<48x128xi1>
    %51 = vector.broadcast %cst_14 : f32 to vector<48x128xf32>
    %52 = arith.select %50, %21, %51 : vector<48x128xi1>, vector<48x128xf32>
    %53 = vector.shape_cast %52 : vector<48x128xf32> to vector<1x48x128xf32>
    %cst_15 = arith.constant dense<0.000000e+00> : vector<1xf32>
    %54 = vector.multi_reduction <add>, %53, %cst_15 [1, 2] : vector<1x48x128xf32> to vector<1xf32>
    %55 = vector.shape_cast %54 : vector<1xf32> to vector<1x1x1xf32>
    %56 = vector.extract %55[0, 0, 0] : f32 from vector<1x1x1xf32>
    %57 = tpu.iota {dimensions = array<i32: 1>} : vector<8x128xi32>
    %c0_16 = arith.constant 0 : index
    %c0_17 = arith.constant 0 : index
    %c0_18 = arith.constant 0 : index
    %58 = vector.load %arg5[%c0_16, %c0_17, %c0_18] : memref<1x8x128xf32, #tpu.memory_space<vmem>>, vector<1x8x128xf32>
    %59 = vector.shape_cast %58 : vector<1x8x128xf32> to vector<8x128xf32>
    %c0_i32_19 = arith.constant 0 : i32
    %60 = vector.broadcast %c0_i32_19 : i32 to vector<8x128xi32>
    %61 = arith.cmpi eq, %57, %60 : vector<8x128xi32>
    %c1_i32 = arith.constant 1 : i32
    %62 = vector.broadcast %c1_i32 : i32 to vector<8x128xi32>
    %63 = arith.cmpi eq, %57, %62 : vector<8x128xi32>
    %c2_i32 = arith.constant 2 : i32
    %64 = vector.broadcast %c2_i32 : i32 to vector<8x128xi32>
    %65 = arith.cmpi eq, %57, %64 : vector<8x128xi32>
    %cst_20 = arith.constant 0.000000e+00 : f32
    %66 = vector.broadcast %42 : f32 to vector<8x128xf32>
    %67 = vector.broadcast %cst_20 : f32 to vector<8x128xf32>
    %68 = arith.select %65, %66, %67 : vector<8x128xi1>, vector<8x128xf32>
    %69 = vector.broadcast %56 : f32 to vector<8x128xf32>
    %70 = arith.select %63, %69, %68 : vector<8x128xi1>, vector<8x128xf32>
    %71 = vector.broadcast %33 : f32 to vector<8x128xf32>
    %72 = arith.select %61, %71, %70 : vector<8x128xi1>, vector<8x128xf32>
    %73 = arith.addf %59, %72 : vector<8x128xf32>
    %c0_21 = arith.constant 0 : index
    %c0_22 = arith.constant 0 : index
    %c0_23 = arith.constant 0 : index
    %74 = vector.load %arg5[%c0_21, %c0_22, %c0_23] : memref<1x8x128xf32, #tpu.memory_space<vmem>>, vector<1x8x128xf32>
    %75 = vector.shape_cast %74 : vector<1x8x128xf32> to vector<8x128xf32>
    %76 = vector.shape_cast %73 : vector<8x128xf32> to vector<1x8x128xf32>
    tpu.vector_store %arg5[%c0_21, %c0_22, %c0_23], %76 {strides = array<i32>} : memref<1x8x128xf32, #tpu.memory_space<vmem>>, vector<1x8x128xf32>,
    return
  }
  func.func @transform_0(%arg0: i32, %arg1: i32) -> (i32, i32) {
    %c0_i32 = arith.constant 0 : i32
    %c0_i32_0 = arith.constant 0 : i32
    return %arg0, %c0_i32 : i32, i32
  }
  func.func @transform_1(%arg0: i32, %arg1: i32) -> (i32, i32) {
    %c0_i32 = arith.constant 0 : i32
    %c0_i32_0 = arith.constant 0 : i32
    return %arg0, %c0_i32 : i32, i32
  }
  func.func @transform_2(%arg0: i32, %arg1: i32) -> (i32, i32) {
    %c0_i32 = arith.constant 0 : i32
    %c0_i32_0 = arith.constant 0 : i32
    return %c0_i32, %arg1 : i32, i32
  }
  func.func @transform_3(%arg0: i32, %arg1: i32) -> (i32, i32, i32) {
    %c0_i32 = arith.constant 0 : i32
    %c0_i32_0 = arith.constant 0 : i32
    %c0_i32_1 = arith.constant 0 : i32
    return %arg0, %c0_i32, %c0_i32_0 : i32, i32, i32
  }
}

module attributes {stable_mosaic.version = 11 : i64} {
  func.func @kernel(%arg0: i32, %arg1: i32, %arg2: memref<32x32xbf16, #tpu.memory_space<vmem>>, %arg3: memref<32x32xbf16, #tpu.memory_space<vmem>>, %arg4: memref<32x256xbf16, #tpu.memory_space<vmem>>, %arg5: memref<1x8x128xf32, #tpu.memory_space<vmem>>) attributes {dimension_semantics = [#tpu.dimension_semantics<parallel>, #tpu.dimension_semantics<arbitrary>], iteration_bounds = array<i64: 2, 1>, scalar_prefetch = 0 : i64, scratch_operands = 0 : i64, tpu.core_type = #tpu.core_type<tc>, window_params = [{transform_indices = @transform_0, window_bounds = array<i64: 32, 32>}, {transform_indices = @transform_1, window_bounds = array<i64: 32, 32>}, {transform_indices = @transform_2, window_bounds = array<i64: 32, 256>}, {transform_indices = @transform_3, window_bounds = array<i64: 1, 8, 128>}]} {
    %c0_i32 = arith.constant 0 : i32
    %0 = arith.cmpi eq, %arg1, %c0_i32 : i32
    %1 = arith.extui %0 : i1 to i32
    %c0_i32_0 = arith.constant 0 : i32
    %2 = arith.cmpi ne, %1, %c0_i32_0 : i32
    scf.if %2 {
      %cst_25 = arith.constant 0.000000e+00 : f32
      %83 = vector.broadcast %cst_25 : f32 to vector<8x128xf32>
      %c0_26 = arith.constant 0 : index
      %c0_27 = arith.constant 0 : index
      %c0_28 = arith.constant 0 : index
      %84 = vector.load %arg5[%c0_26, %c0_27, %c0_28] : memref<1x8x128xf32, #tpu.memory_space<vmem>>, vector<1x8x128xf32>
      %85 = vector.shape_cast %84 : vector<1x8x128xf32> to vector<8x128xf32>
      %86 = vector.shape_cast %83 : vector<8x128xf32> to vector<1x8x128xf32>
      tpu.vector_store %arg5[%c0_26, %c0_27, %c0_28], %86 {strides = array<i32>} : memref<1x8x128xf32, #tpu.memory_space<vmem>>, vector<1x8x128xf32>,
    } else {
    }
    %c0 = arith.constant 0 : index
    %c0_1 = arith.constant 0 : index
    %3 = vector.load %arg4[%c0, %c0_1] : memref<32x256xbf16, #tpu.memory_space<vmem>>, vector<32x256xbf16>
    %c0_2 = arith.constant 0 : index
    %c0_3 = arith.constant 0 : index
    %4 = vector.load %arg2[%c0_2, %c0_3] : memref<32x32xbf16, #tpu.memory_space<vmem>>, vector<32x32xbf16>
    %cst = arith.constant dense<0.000000e+00> : vector<32x256xf32>
    %5 = tpu.matmul %4, %3, %cst {dimension_numbers = #tpu.dot_dimension_numbers<[1], [0], [0], [1], [0, 0, 1, 1], [], []>} : vector<32x32xbf16>, vector<32x256xbf16>, vector<32x256xf32> -> vector<32x256xf32>
    %c0_4 = arith.constant 0 : index
    %c0_5 = arith.constant 0 : index
    %6 = vector.load %arg3[%c0_4, %c0_5] : memref<32x32xbf16, #tpu.memory_space<vmem>>, vector<32x32xbf16>
    %cst_6 = arith.constant dense<0.000000e+00> : vector<32x256xf32>
    %7 = tpu.matmul %6, %3, %cst_6 {dimension_numbers = #tpu.dot_dimension_numbers<[1], [0], [0], [1], [0, 0, 1, 1], [], []>} : vector<32x32xbf16>, vector<32x256xbf16>, vector<32x256xf32> -> vector<32x256xf32>
    %8 = vector.extract_strided_slice %5 {offsets = [0, 0], sizes = [32, 128], strides = [1, 1]} : vector<32x256xf32> to vector<32x128xf32>
    %9 = vector.extract_strided_slice %5 {offsets = [0, 128], sizes = [32, 128], strides = [1, 1]} : vector<32x256xf32> to vector<32x128xf32>
    %10 = vector.extract_strided_slice %7 {offsets = [0, 0], sizes = [32, 128], strides = [1, 1]} : vector<32x256xf32> to vector<32x128xf32>
    %11 = vector.extract_strided_slice %7 {offsets = [0, 128], sizes = [32, 128], strides = [1, 1]} : vector<32x256xf32> to vector<32x128xf32>
    %12 = arith.mulf %8, %8 : vector<32x128xf32>
    %13 = arith.mulf %9, %9 : vector<32x128xf32>
    %14 = arith.addf %12, %13 : vector<32x128xf32>
    %cst_7 = arith.constant 1.000000e-07 : f32
    %15 = vector.broadcast %cst_7 : f32 to vector<32x128xf32>
    %16 = arith.maximumf %14, %15 : vector<32x128xf32>
    %17 = arith.mulf %10, %10 : vector<32x128xf32>
    %18 = arith.mulf %11, %11 : vector<32x128xf32>
    %19 = arith.addf %17, %18 : vector<32x128xf32>
    %cst_8 = arith.constant 1.000000e-07 : f32
    %20 = vector.broadcast %cst_8 : f32 to vector<32x128xf32>
    %21 = arith.maximumf %19, %20 : vector<32x128xf32>
    %22 = arith.addf %16, %21 : vector<32x128xf32>
    %23 = arith.mulf %16, %21 : vector<32x128xf32>
    %24 = math.sqrt %23 : vector<32x128xf32>
    %cst_9 = arith.constant 2.000000e+00 : f32
    %25 = vector.broadcast %cst_9 : f32 to vector<32x128xf32>
    %26 = arith.mulf %25, %24 : vector<32x128xf32>
    %27 = arith.subf %22, %26 : vector<32x128xf32>
    %cst_10 = arith.constant 0.000000e+00 : f32
    %28 = vector.broadcast %cst_10 : f32 to vector<32x128xf32>
    %29 = arith.maximumf %27, %28 : vector<32x128xf32>
    %30 = vector.shape_cast %29 : vector<32x128xf32> to vector<1x32x128xf32>
    %cst_11 = arith.constant dense<0.000000e+00> : vector<1xf32>
    %31 = vector.multi_reduction <add>, %30, %cst_11 [1, 2] : vector<1x32x128xf32> to vector<1xf32>
    %32 = vector.shape_cast %31 : vector<1xf32> to vector<1x1x1xf32>
    %33 = vector.extract %32[0, 0, 0] : f32 from vector<1x1x1xf32>
    %34 = math.log %21 : vector<32x128xf32>
    %35 = math.log %16 : vector<32x128xf32>
    %36 = arith.subf %34, %35 : vector<32x128xf32>
    %37 = math.absf %36 : vector<32x128xf32>
    %38 = vector.shape_cast %37 : vector<32x128xf32> to vector<1x32x128xf32>
    %cst_12 = arith.constant dense<0.000000e+00> : vector<1xf32>
    %39 = vector.multi_reduction <add>, %38, %cst_12 [1, 2] : vector<1x32x128xf32> to vector<1xf32>
    %40 = vector.shape_cast %39 : vector<1xf32> to vector<1x1x1xf32>
    %41 = vector.extract %40[0, 0, 0] : f32 from vector<1x1x1xf32>
    %cst_13 = arith.constant 5.000000e-01 : f32
    %42 = arith.mulf %cst_13, %41 : f32
    %c128_i32 = arith.constant 128 : i32
    %43 = arith.muli %arg1, %c128_i32 : i32
    %44 = tpu.iota {dimensions = array<i32: 1>} : vector<1x128xi32>
    %45 = vector.broadcast %43 : i32 to vector<1x128xi32>
    %46 = arith.addi %45, %44 : vector<1x128xi32>
    %c17_i32 = arith.constant 17 : i32
    %47 = vector.broadcast %c17_i32 : i32 to vector<1x128xi32>
    %48 = arith.cmpi slt, %46, %47 : vector<1x128xi32>
    %49 = tpu.iota {dimensions = array<i32: 0>} : vector<32x1xi32>
    %c0_i32_14 = arith.constant 0 : i32
    %50 = vector.broadcast %c0_i32_14 : i32 to vector<32x1xi32>
    %51 = arith.addi %50, %49 : vector<32x1xi32>
    %c26_i32 = arith.constant 26 : i32
    %52 = vector.broadcast %c26_i32 : i32 to vector<32x1xi32>
    %53 = arith.cmpi slt, %51, %52 : vector<32x1xi32>
    %54 = vector.broadcast %53 : vector<32x1xi1> to vector<32x128xi1>
    %55 = vector.broadcast %48 : vector<1x128xi1> to vector<32x128xi1>
    %56 = arith.andi %54, %55 : vector<32x128xi1>
    %cst_15 = arith.constant 0.000000e+00 : f32
    %57 = vector.broadcast %cst_15 : f32 to vector<32x128xf32>
    %58 = arith.select %56, %21, %57 : vector<32x128xi1>, vector<32x128xf32>
    %59 = vector.shape_cast %58 : vector<32x128xf32> to vector<1x32x128xf32>
    %cst_16 = arith.constant dense<0.000000e+00> : vector<1xf32>
    %60 = vector.multi_reduction <add>, %59, %cst_16 [1, 2] : vector<1x32x128xf32> to vector<1xf32>
    %61 = vector.shape_cast %60 : vector<1xf32> to vector<1x1x1xf32>
    %62 = vector.extract %61[0, 0, 0] : f32 from vector<1x1x1xf32>
    %63 = tpu.iota {dimensions = array<i32: 1>} : vector<8x128xi32>
    %c0_17 = arith.constant 0 : index
    %c0_18 = arith.constant 0 : index
    %c0_19 = arith.constant 0 : index
    %64 = vector.load %arg5[%c0_17, %c0_18, %c0_19] : memref<1x8x128xf32, #tpu.memory_space<vmem>>, vector<1x8x128xf32>
    %65 = vector.shape_cast %64 : vector<1x8x128xf32> to vector<8x128xf32>
    %c0_i32_20 = arith.constant 0 : i32
    %66 = vector.broadcast %c0_i32_20 : i32 to vector<8x128xi32>
    %67 = arith.cmpi eq, %63, %66 : vector<8x128xi32>
    %c1_i32 = arith.constant 1 : i32
    %68 = vector.broadcast %c1_i32 : i32 to vector<8x128xi32>
    %69 = arith.cmpi eq, %63, %68 : vector<8x128xi32>
    %c2_i32 = arith.constant 2 : i32
    %70 = vector.broadcast %c2_i32 : i32 to vector<8x128xi32>
    %71 = arith.cmpi eq, %63, %70 : vector<8x128xi32>
    %cst_21 = arith.constant 0.000000e+00 : f32
    %72 = vector.broadcast %42 : f32 to vector<8x128xf32>
    %73 = vector.broadcast %cst_21 : f32 to vector<8x128xf32>
    %74 = arith.select %71, %72, %73 : vector<8x128xi1>, vector<8x128xf32>
    %75 = vector.broadcast %62 : f32 to vector<8x128xf32>
    %76 = arith.select %69, %75, %74 : vector<8x128xi1>, vector<8x128xf32>
    %77 = vector.broadcast %33 : f32 to vector<8x128xf32>
    %78 = arith.select %67, %77, %76 : vector<8x128xi1>, vector<8x128xf32>
    %79 = arith.addf %65, %78 : vector<8x128xf32>
    %c0_22 = arith.constant 0 : index
    %c0_23 = arith.constant 0 : index
    %c0_24 = arith.constant 0 : index
    %80 = vector.load %arg5[%c0_22, %c0_23, %c0_24] : memref<1x8x128xf32, #tpu.memory_space<vmem>>, vector<1x8x128xf32>
    %81 = vector.shape_cast %80 : vector<1x8x128xf32> to vector<8x128xf32>
    %82 = vector.shape_cast %79 : vector<8x128xf32> to vector<1x8x128xf32>
    tpu.vector_store %arg5[%c0_22, %c0_23, %c0_24], %82 {strides = array<i32>} : memref<1x8x128xf32, #tpu.memory_space<vmem>>, vector<1x8x128xf32>,
    return
  }
  func.func @transform_0(%arg0: i32, %arg1: i32) -> (i32, i32) {
    %c0_i32 = arith.constant 0 : i32
    %c0_i32_0 = arith.constant 0 : i32
    return %arg0, %c0_i32 : i32, i32
  }
  func.func @transform_1(%arg0: i32, %arg1: i32) -> (i32, i32) {
    %c0_i32 = arith.constant 0 : i32
    %c0_i32_0 = arith.constant 0 : i32
    return %arg0, %c0_i32 : i32, i32
  }
  func.func @transform_2(%arg0: i32, %arg1: i32) -> (i32, i32) {
    %c0_i32 = arith.constant 0 : i32
    %c0_i32_0 = arith.constant 0 : i32
    return %c0_i32, %arg1 : i32, i32
  }
  func.func @transform_3(%arg0: i32, %arg1: i32) -> (i32, i32, i32) {
    %c0_i32 = arith.constant 0 : i32
    %c0_i32_0 = arith.constant 0 : i32
    %c0_i32_1 = arith.constant 0 : i32
    return %arg0, %c0_i32, %c0_i32_0 : i32, i32, i32
  }
}

module attributes {stable_mosaic.version = 11 : i64} {
  func.func @kernel(%arg0: i32, %arg1: i32, %arg2: memref<32x32xbf16, #tpu.memory_space<vmem>>, %arg3: memref<32x32xbf16, #tpu.memory_space<vmem>>, %arg4: memref<32x256xbf16, #tpu.memory_space<vmem>>, %arg5: memref<1x8x128xf32, #tpu.memory_space<vmem>>) attributes {dimension_semantics = [#tpu.dimension_semantics<parallel>, #tpu.dimension_semantics<arbitrary>], iteration_bounds = array<i64: 2, 1>, scalar_prefetch = 0 : i64, scratch_operands = 0 : i64, tpu.core_type = #tpu.core_type<tc>, window_params = [{transform_indices = @transform_0, window_bounds = array<i64: 32, 32>}, {transform_indices = @transform_1, window_bounds = array<i64: 32, 32>}, {transform_indices = @transform_2, window_bounds = array<i64: 32, 256>}, {transform_indices = @transform_3, window_bounds = array<i64: 1, 8, 128>}]} {
    %c0_i32 = arith.constant 0 : i32
    %0 = arith.cmpi eq, %arg1, %c0_i32 : i32
    %1 = arith.extui %0 : i1 to i32
    %c0_i32_0 = arith.constant 0 : i32
    %2 = arith.cmpi ne, %1, %c0_i32_0 : i32
    scf.if %2 {
      %cst_24 = arith.constant 0.000000e+00 : f32
      %77 = vector.broadcast %cst_24 : f32 to vector<8x128xf32>
      %c0_25 = arith.constant 0 : index
      %c0_26 = arith.constant 0 : index
      %c0_27 = arith.constant 0 : index
      %78 = vector.load %arg5[%c0_25, %c0_26, %c0_27] : memref<1x8x128xf32, #tpu.memory_space<vmem>>, vector<1x8x128xf32>
      %79 = vector.shape_cast %78 : vector<1x8x128xf32> to vector<8x128xf32>
      %80 = vector.shape_cast %77 : vector<8x128xf32> to vector<1x8x128xf32>
      tpu.vector_store %arg5[%c0_25, %c0_26, %c0_27], %80 {strides = array<i32>} : memref<1x8x128xf32, #tpu.memory_space<vmem>>, vector<1x8x128xf32>,
    } else {
    }
    %c0 = arith.constant 0 : index
    %c0_1 = arith.constant 0 : index
    %3 = vector.load %arg4[%c0, %c0_1] : memref<32x256xbf16, #tpu.memory_space<vmem>>, vector<32x256xbf16>
    %c0_2 = arith.constant 0 : index
    %c0_3 = arith.constant 0 : index
    %4 = vector.load %arg2[%c0_2, %c0_3] : memref<32x32xbf16, #tpu.memory_space<vmem>>, vector<32x32xbf16>
    %cst = arith.constant dense<0.000000e+00> : vector<32x256xf32>
    %5 = tpu.matmul %4, %3, %cst {dimension_numbers = #tpu.dot_dimension_numbers<[1], [0], [0], [1], [0, 0, 1, 1], [], []>} : vector<32x32xbf16>, vector<32x256xbf16>, vector<32x256xf32> -> vector<32x256xf32>
    %c0_4 = arith.constant 0 : index
    %c0_5 = arith.constant 0 : index
    %6 = vector.load %arg3[%c0_4, %c0_5] : memref<32x32xbf16, #tpu.memory_space<vmem>>, vector<32x32xbf16>
    %cst_6 = arith.constant dense<0.000000e+00> : vector<32x256xf32>
    %7 = tpu.matmul %6, %3, %cst_6 {dimension_numbers = #tpu.dot_dimension_numbers<[1], [0], [0], [1], [0, 0, 1, 1], [], []>} : vector<32x32xbf16>, vector<32x256xbf16>, vector<32x256xf32> -> vector<32x256xf32>
    %8 = vector.extract_strided_slice %5 {offsets = [0, 0], sizes = [32, 128], strides = [1, 1]} : vector<32x256xf32> to vector<32x128xf32>
    %9 = vector.extract_strided_slice %5 {offsets = [0, 128], sizes = [32, 128], strides = [1, 1]} : vector<32x256xf32> to vector<32x128xf32>
    %10 = vector.extract_strided_slice %7 {offsets = [0, 0], sizes = [32, 128], strides = [1, 1]} : vector<32x256xf32> to vector<32x128xf32>
    %11 = vector.extract_strided_slice %7 {offsets = [0, 128], sizes = [32, 128], strides = [1, 1]} : vector<32x256xf32> to vector<32x128xf32>
    %12 = arith.mulf %8, %8 : vector<32x128xf32>
    %13 = arith.mulf %9, %9 : vector<32x128xf32>
    %14 = arith.addf %12, %13 : vector<32x128xf32>
    %cst_7 = arith.constant 1.000000e-07 : f32
    %15 = vector.broadcast %cst_7 : f32 to vector<32x128xf32>
    %16 = arith.maximumf %14, %15 : vector<32x128xf32>
    %17 = arith.mulf %10, %10 : vector<32x128xf32>
    %18 = arith.mulf %11, %11 : vector<32x128xf32>
    %19 = arith.addf %17, %18 : vector<32x128xf32>
    %cst_8 = arith.constant 1.000000e-07 : f32
    %20 = vector.broadcast %cst_8 : f32 to vector<32x128xf32>
    %21 = arith.maximumf %19, %20 : vector<32x128xf32>
    %22 = arith.addf %16, %21 : vector<32x128xf32>
    %23 = arith.mulf %16, %21 : vector<32x128xf32>
    %24 = math.sqrt %23 : vector<32x128xf32>
    %cst_9 = arith.constant 2.000000e+00 : f32
    %25 = vector.broadcast %cst_9 : f32 to vector<32x128xf32>
    %26 = arith.mulf %25, %24 : vector<32x128xf32>
    %27 = arith.subf %22, %26 : vector<32x128xf32>
    %cst_10 = arith.constant 0.000000e+00 : f32
    %28 = vector.broadcast %cst_10 : f32 to vector<32x128xf32>
    %29 = arith.maximumf %27, %28 : vector<32x128xf32>
    %30 = vector.shape_cast %29 : vector<32x128xf32> to vector<1x32x128xf32>
    %cst_11 = arith.constant dense<0.000000e+00> : vector<1xf32>
    %31 = vector.multi_reduction <add>, %30, %cst_11 [1, 2] : vector<1x32x128xf32> to vector<1xf32>
    %32 = vector.shape_cast %31 : vector<1xf32> to vector<1x1x1xf32>
    %33 = vector.extract %32[0, 0, 0] : f32 from vector<1x1x1xf32>
    %34 = math.log %21 : vector<32x128xf32>
    %35 = math.log %16 : vector<32x128xf32>
    %36 = arith.subf %34, %35 : vector<32x128xf32>
    %37 = math.absf %36 : vector<32x128xf32>
    %38 = vector.shape_cast %37 : vector<32x128xf32> to vector<1x32x128xf32>
    %cst_12 = arith.constant dense<0.000000e+00> : vector<1xf32>
    %39 = vector.multi_reduction <add>, %38, %cst_12 [1, 2] : vector<1x32x128xf32> to vector<1xf32>
    %40 = vector.shape_cast %39 : vector<1xf32> to vector<1x1x1xf32>
    %41 = vector.extract %40[0, 0, 0] : f32 from vector<1x1x1xf32>
    %cst_13 = arith.constant 5.000000e-01 : f32
    %42 = arith.mulf %cst_13, %41 : f32
    %c128_i32 = arith.constant 128 : i32
    %43 = arith.muli %arg1, %c128_i32 : i32
    %44 = tpu.iota {dimensions = array<i32: 1>} : vector<1x128xi32>
    %45 = vector.broadcast %43 : i32 to vector<1x128xi32>
    %46 = arith.addi %45, %44 : vector<1x128xi32>
    %c17_i32 = arith.constant 17 : i32
    %47 = vector.broadcast %c17_i32 : i32 to vector<1x128xi32>
    %48 = arith.cmpi slt, %46, %47 : vector<1x128xi32>
    %cst_14 = arith.constant 0.000000e+00 : f32
    %49 = vector.shape_cast %48 : vector<1x128xi1> to vector<1x128xi1>
    %50 = vector.broadcast %49 : vector<1x128xi1> to vector<32x128xi1>
    %51 = vector.broadcast %cst_14 : f32 to vector<32x128xf32>
    %52 = arith.select %50, %21, %51 : vector<32x128xi1>, vector<32x128xf32>
    %53 = vector.shape_cast %52 : vector<32x128xf32> to vector<1x32x128xf32>
    %cst_15 = arith.constant dense<0.000000e+00> : vector<1xf32>
    %54 = vector.multi_reduction <add>, %53, %cst_15 [1, 2] : vector<1x32x128xf32> to vector<1xf32>
    %55 = vector.shape_cast %54 : vector<1xf32> to vector<1x1x1xf32>
    %56 = vector.extract %55[0, 0, 0] : f32 from vector<1x1x1xf32>
    %57 = tpu.iota {dimensions = array<i32: 1>} : vector<8x128xi32>
    %c0_16 = arith.constant 0 : index
    %c0_17 = arith.constant 0 : index
    %c0_18 = arith.constant 0 : index
    %58 = vector.load %arg5[%c0_16, %c0_17, %c0_18] : memref<1x8x128xf32, #tpu.memory_space<vmem>>, vector<1x8x128xf32>
    %59 = vector.shape_cast %58 : vector<1x8x128xf32> to vector<8x128xf32>
    %c0_i32_19 = arith.constant 0 : i32
    %60 = vector.broadcast %c0_i32_19 : i32 to vector<8x128xi32>
    %61 = arith.cmpi eq, %57, %60 : vector<8x128xi32>
    %c1_i32 = arith.constant 1 : i32
    %62 = vector.broadcast %c1_i32 : i32 to vector<8x128xi32>
    %63 = arith.cmpi eq, %57, %62 : vector<8x128xi32>
    %c2_i32 = arith.constant 2 : i32
    %64 = vector.broadcast %c2_i32 : i32 to vector<8x128xi32>
    %65 = arith.cmpi eq, %57, %64 : vector<8x128xi32>
    %cst_20 = arith.constant 0.000000e+00 : f32
    %66 = vector.broadcast %42 : f32 to vector<8x128xf32>
    %67 = vector.broadcast %cst_20 : f32 to vector<8x128xf32>
    %68 = arith.select %65, %66, %67 : vector<8x128xi1>, vector<8x128xf32>
    %69 = vector.broadcast %56 : f32 to vector<8x128xf32>
    %70 = arith.select %63, %69, %68 : vector<8x128xi1>, vector<8x128xf32>
    %71 = vector.broadcast %33 : f32 to vector<8x128xf32>
    %72 = arith.select %61, %71, %70 : vector<8x128xi1>, vector<8x128xf32>
    %73 = arith.addf %59, %72 : vector<8x128xf32>
    %c0_21 = arith.constant 0 : index
    %c0_22 = arith.constant 0 : index
    %c0_23 = arith.constant 0 : index
    %74 = vector.load %arg5[%c0_21, %c0_22, %c0_23] : memref<1x8x128xf32, #tpu.memory_space<vmem>>, vector<1x8x128xf32>
    %75 = vector.shape_cast %74 : vector<1x8x128xf32> to vector<8x128xf32>
    %76 = vector.shape_cast %73 : vector<8x128xf32> to vector<1x8x128xf32>
    tpu.vector_store %arg5[%c0_21, %c0_22, %c0_23], %76 {strides = array<i32>} : memref<1x8x128xf32, #tpu.memory_space<vmem>>, vector<1x8x128xf32>,
    return
  }
  func.func @transform_0(%arg0: i32, %arg1: i32) -> (i32, i32) {
    %c0_i32 = arith.constant 0 : i32
    %c0_i32_0 = arith.constant 0 : i32
    return %arg0, %c0_i32 : i32, i32
  }
  func.func @transform_1(%arg0: i32, %arg1: i32) -> (i32, i32) {
    %c0_i32 = arith.constant 0 : i32
    %c0_i32_0 = arith.constant 0 : i32
    return %arg0, %c0_i32 : i32, i32
  }
  func.func @transform_2(%arg0: i32, %arg1: i32) -> (i32, i32) {
    %c0_i32 = arith.constant 0 : i32
    %c0_i32_0 = arith.constant 0 : i32
    return %c0_i32, %arg1 : i32, i32
  }
  func.func @transform_3(%arg0: i32, %arg1: i32) -> (i32, i32, i32) {
    %c0_i32 = arith.constant 0 : i32
    %c0_i32_0 = arith.constant 0 : i32
    %c0_i32_1 = arith.constant 0 : i32
    return %arg0, %c0_i32, %c0_i32_0 : i32, i32, i32
  }
}

</mosaic_0001>

<llo_original>
// kernel: loss.3
$region0: #{loss.3}
  #allocation0 [shape = 'u32[]', space=smem, size = 0x4, offset = 0x4, fixed_abs, tag = 'smem constant byte address 0x4 - core index']
  #allocation1 [shape = 'u32[144,128]{1,0:T(1,128)}', space=vmem, size = 0x12000, scoped, tag = 'internal scratch']
  %s0 = inlined_call_operand.vmem [shape: bf16[96,16], index: 0, kind: input, shape index: {}]
  %s1 = inlined_call_operand.vmem [shape: bf16[96,16], index: 1, kind: input, shape index: {}]
  %s2 = inlined_call_operand.vmem [shape: bf16[16,256], index: 2, kind: input, shape index: {}]
  %s3 = inlined_call_operand.vmem [shape: f32[2,8,128], index: 3, kind: output, shape index: {}]
  %s4 = sld [smem:[#allocation0]]
  $region49: #{loss.3} parent=0
    _
  %s6 = ssub.s32 1, %s4
  %s7 = scalar_select 0, %s6, %s4
  loop: start=0, step=1, limit=4
  $region2: #{loss.3} parent=0 // loop_pre_header
    _
  $region3: #{loss.3} parent=0 // loop_header
    %s9 = sphi 0, %s13
    %p10 = scmp.ge.s32.totalorder %s9, 4
    %s16 = sphi 0, %s28
    %s17 = sphi 0, %s24
    %s18 = sphi 0, %s16
    %s19 = sphi 0, %s17
    %s20 = sphi 0, %s18
    %s21 = sphi 0, %s19
    %s31 = sphi 0, %s33
    %s34 = sphi 0, %s31
    %s35 = sphi 0, %s34
    %s51 = sphi 0, %s35
    %s57 = sphi 0, %s59
    %s60 = sphi 0, %s57
    %s61 = sphi 0, %s60
    %s77 = sphi 0, %s61
    %s83 = sphi 0, %s85
    %s86 = sphi 0, %s83
    %s87 = sphi 0, %s86
    %s103 = sphi 0, %s87
    %s109 = sphi 0, %s111
    %s112 = sphi 0, %s109
    %s113 = sphi 0, %s112
    %s129 = sphi 0, %s113
  $region4: #{loss.3} parent=0 // loop_header_branch
    %12 = sbr.rel (%p10) target = $region8
  $region5: #{loss.3} parent=0 // loop_body
    %s14 = ssub.s32 %s9, 1
    %s15 = ssub.s32 %s9, 2
    %s22 = sadd.s32 1, %s17
    %p23 = scmp.ge.s32.totalorder %s22, 1
    %s24 = scalar_select %p23, 0, %s22
    %s25 = sadd.s32 1, %s16
    %s26 = scalar_select %p23, %s25, %s16
    %p27 = scmp.ge.s32.totalorder %s26, 2
    %s28 = scalar_select %p27, 0, %s26
    %s29 = ssub.s32 %s16, %s28
    %p30 = scmp.eq.s32.totalorder %s29, 0
    %s32 = sadd.s32 %s31, 1
    %s33 = scalar_select %p30, %s31, %s32
    %p36 = pneg %p30
    %p37 = scmp.eq.s32.totalorder %s9, 1
    %p38 = por %p36, %p37
    %p39 = scmp.ne.s32.totalorder %s31, %s34
    %p40 = scmp.eq.s32.totalorder %s9, 0
    %p41 = por %p39, %p40
    %p42 = scmp.ne.s32.totalorder %s31, %s34
    %p43 = scmp.eq.s32.totalorder %s14, 1
    %p44 = por %p42, %p43
    %p45 = scmp.ne.s32.totalorder %s34, %s35
    %p46 = scmp.eq.s32.totalorder %s14, 0
    %p47 = por %p45, %p46
    %p48 = scmp.ne.s32.totalorder %s34, %s35
    %p49 = scmp.eq.s32.totalorder %s15, 1
    %p50 = por %p48, %p49
    %p52 = scmp.ne.s32.totalorder %s35, %s51
    %p53 = scmp.eq.s32.totalorder %s15, 0
    %p54 = por %p52, %p53
    %s55 = ssub.s32 %s16, %s28
    %p56 = scmp.eq.s32.totalorder %s55, 0
    %s58 = sadd.s32 %s57, 1
    %s59 = scalar_select %p56, %s57, %s58
    %p62 = pneg %p56
    %p63 = scmp.eq.s32.totalorder %s9, 1
    %p64 = por %p62, %p63
    %p65 = scmp.ne.s32.totalorder %s57, %s60
    %p66 = scmp.eq.s32.totalorder %s9, 0
    %p67 = por %p65, %p66
    %p68 = scmp.ne.s32.totalorder %s57, %s60
    %p69 = scmp.eq.s32.totalorder %s14, 1
    %p70 = por %p68, %p69
    %p71 = scmp.ne.s32.totalorder %s60, %s61
    %p72 = scmp.eq.s32.totalorder %s14, 0
    %p73 = por %p71, %p72
    %p74 = scmp.ne.s32.totalorder %s60, %s61
    %p75 = scmp.eq.s32.totalorder %s15, 1
    %p76 = por %p74, %p75
    %p78 = scmp.ne.s32.totalorder %s61, %s77
    %p79 = scmp.eq.s32.totalorder %s15, 0
    %p80 = por %p78, %p79
    %s81 = ssub.s32 %s17, %s24
    %p82 = scmp.eq.s32.totalorder %s81, 0
    %s84 = sadd.s32 %s83, 1
    %s85 = scalar_select %p82, %s83, %s84
    %p88 = pneg %p82
    %p89 = scmp.eq.s32.totalorder %s9, 1
    %p90 = por %p88, %p89
    %p91 = scmp.ne.s32.totalorder %s83, %s86
    %p92 = scmp.eq.s32.totalorder %s9, 0
    %p93 = por %p91, %p92
    %p94 = scmp.ne.s32.totalorder %s83, %s86
    %p95 = scmp.eq.s32.totalorder %s14, 1
    %p96 = por %p94, %p95
    %p97 = scmp.ne.s32.totalorder %s86, %s87
    %p98 = scmp.eq.s32.totalorder %s14, 0
    %p99 = por %p97, %p98
    %p100 = scmp.ne.s32.totalorder %s86, %s87
    %p101 = scmp.eq.s32.totalorder %s15, 1
    %p102 = por %p100, %p101
    %p104 = scmp.ne.s32.totalorder %s87, %s103
    %p105 = scmp.eq.s32.totalorder %s15, 0
    %p106 = por %p104, %p105
    %s107 = ssub.s32 %s16, %s28
    %p108 = scmp.eq.s32.totalorder %s107, 0
    %s110 = sadd.s32 %s109, 1
    %s111 = scalar_select %p108, %s109, %s110
    %p114 = pneg %p108
    %p115 = scmp.eq.s32.totalorder %s9, 1
    %p116 = por %p114, %p115
    %p117 = scmp.ne.s32.totalorder %s109, %s112
    %p118 = scmp.eq.s32.totalorder %s9, 0
    %p119 = por %p117, %p118
    %p120 = scmp.ne.s32.totalorder %s109, %s112
    %p121 = scmp.eq.s32.totalorder %s14, 1
    %p122 = por %p120, %p121
    %p123 = scmp.ne.s32.totalorder %s112, %s113
    %p124 = scmp.eq.s32.totalorder %s14, 0
    %p125 = por %p123, %p124
    %p126 = scmp.ne.s32.totalorder %s112, %s113
    %p127 = scmp.eq.s32.totalorder %s15, 1
    %p128 = por %p126, %p127
    %p130 = scmp.ne.s32.totalorder %s113, %s129
    %p131 = scmp.eq.s32.totalorder %s15, 0
    %p132 = por %p130, %p131
    %p133 = scmp.le.s32.totalorder 1, %s9
    %p134 = scmp.lt.s32.totalorder %s9, 3
    %p135 = pnand %p133, %p134
    %p136 = pneg %p135
    // Predicated region
    $region9: #{loss.3} parent=5 // pred_check
      _
    $region10: #{loss.3} parent=5 // pred_check_branch
      %138 = sbr.rel (%p135) target = $region12
    $region11: #{loss.3} parent=5 // pred_region
      %s139 = ssub.s32 %s9, 1
      // Predicated region
      $region13: #{loss.3} parent=11 // pred_check
        %p140 = pneg %p99
      $region14: #{loss.3} parent=11 // pred_check_branch
        %142 = sbr.rel (%p140) target = $region16
      $region15: #{loss.3} parent=11 // pred_region
        %s143 = smul.u32 2, %s19
        %p144 = scmp.lt.s32.totalorder %s143, 1
        %s145 = scalar_select %p144, %s143, 1
        %s146 = smul.addr %s145, 4
        %s147 = scalar_lea.vmem %s2, %s146
        %s148 = smul.u32 2, %s19
      $region16: #{loss.3} parent=11 // pred_fallthru
        _
    $region12: #{loss.3} parent=5 // pred_fallthru
      _
    %p149 = scmp.lt.s32.totalorder %s9, 2
    // Predicated region
    $region17: #{loss.3} parent=5 // pred_check
      %p150 = pneg %p149
    $region18: #{loss.3} parent=5 // pred_check_branch
      %152 = sbr.rel (%p150) target = $region20
    $region19: #{loss.3} parent=5 // pred_region
      // Predicated region
      $region21: #{loss.3} parent=19 // pred_check
        %p153 = pneg %p41
      $region22: #{loss.3} parent=19 // pred_check_branch
        %155 = sbr.rel (%p153) target = $region24
      $region23: #{loss.3} parent=19 // pred_region
        %s156 = smul.u32 6, %s16
        %p157 = scmp.lt.s32.totalorder %s156, 11
        %s158 = scalar_select %p157, %s156, 11
        %s159 = smul.addr %s158, 4
        %s160 = scalar_lea.vmem %s0, %s159
        %s161 = smul.u32 6, %s16
      $region24: #{loss.3} parent=19 // pred_fallthru
        _
      // Predicated region
      $region25: #{loss.3} parent=19 // pred_check
        %p162 = pneg %p67
      $region26: #{loss.3} parent=19 // pred_check_branch
        %164 = sbr.rel (%p162) target = $region28
      $region27: #{loss.3} parent=19 // pred_region
        %s165 = smul.u32 6, %s16
        %p166 = scmp.lt.s32.totalorder %s165, 11
        %s167 = scalar_select %p166, %s165, 11
        %s168 = smul.addr %s167, 4
        %s169 = scalar_lea.vmem %s1, %s168
        %s170 = smul.u32 6, %s16
      $region28: #{loss.3} parent=19 // pred_fallthru
        _
    $region20: #{loss.3} parent=5 // pred_fallthru
      _
    %p171 = scmp.le.s32.totalorder 1, %s9
    %p172 = scmp.lt.s32.totalorder %s9, 3
    %p173 = pnand %p171, %p172
    %p174 = pneg %p173
    // Predicated region
    $region29: #{loss.3} parent=5 // pred_check
      _
    $region30: #{loss.3} parent=5 // pred_check_branch
      %176 = sbr.rel (%p173) target = $region32
    $region31: #{loss.3} parent=5 // pred_region
      %s177 = ssub.s32 %s9, 1
      %s178 = smul.u32 6, %s18
      %p179 = scmp.lt.s32.totalorder %s178, 11
      %s180 = scalar_select %p179, %s178, 11
      %s181 = smul.addr %s180, 4
      %s182 = scalar_lea.vmem %s0, %s181
      %p183 = pneg %p47
      %p184 = pneg %p44
      %s185 = smul.u32 6, %s18
      %p186 = scmp.lt.s32.totalorder %s185, 11
      %s187 = scalar_select %p186, %s185, 11
      %s188 = smul.addr %s187, 4
      %s189 = scalar_lea.vmem %s1, %s188
      %p190 = pneg %p73
      %p191 = pneg %p70
      %s192 = smul.u32 2, %s19
      %p193 = scmp.lt.s32.totalorder %s192, 1
      %s194 = scalar_select %p193, %s192, 1
      %s195 = smul.addr %s194, 4
      %s196 = scalar_lea.vmem %s2, %s195
      %p197 = pneg %p99
      %p198 = pneg %p96
      %p199 = pneg %p125
      %p200 = pneg %p122
      %p201 = scmp.lt.s32.totalorder %s18, 1
      %s202 = scalar_select %p201, %s18, 1
      %s203 = smul.addr %s202, 8
      %s204 = scalar_lea.vmem %s3, %s203
      %s205 = smul.u32 6, %s18
      %p206 = scmp.lt.s32.totalorder %s205, 11
      %s207 = scalar_select %p206, %s205, 11
      %s208 = smul.addr %s207, 4
      %s209 = scalar_lea.vmem %s0, %s208
      %s210 = smul.u32 6, %s18
      %s211 = smul.u32 6, %s18
      %p212 = scmp.lt.s32.totalorder %s211, 11
      %s213 = scalar_select %p212, %s211, 11
      %s214 = smul.addr %s213, 4
      %s215 = scalar_lea.vmem %s1, %s214
      %s216 = smul.u32 6, %s18
      %s217 = smul.u32 2, %s19
      %p218 = scmp.lt.s32.totalorder %s217, 1
      %s219 = scalar_select %p218, %s217, 1
      %s220 = smul.addr %s219, 4
      %s221 = scalar_lea.vmem %s2, %s220
      %s222 = smul.u32 2, %s19
      %p223 = scmp.lt.s32.totalorder %s18, 1
      %s224 = scalar_select %p223, %s18, 1
      %s225 = smul.addr %s224, 8
      %s226 = scalar_lea.vmem %s3, %s225
      %p228 = scmp.eq.s32.totalorder %s19, 0
      // Predicated region
      $region33: #{loss.3} parent=31 // pred_check
        %p229 = pneg %p228
      $region34: #{loss.3} parent=31 // pred_check_branch
        %231 = sbr.rel (%p229) target = $region36
      $region35: #{loss.3} parent=31 // pred_region
        %232 = vst [vmem:[%s226] sm:$0xff] 0.0
      $region36: #{loss.3} parent=31 // pred_fallthru
        _
      %v233 = vld [vmem:[%s221] sm:$0xff]
      %v234 = vld [vmem:[%s221 + $0x8] sm:$0xff]
      %v235 = vld [vmem:[%s209] sm:$0xf]
      %v236 = vld [vmem:[%s209 + $0x4] sm:$0xf]
      %v237 = vld [vmem:[%s209 + $0x8] sm:$0xf]
      %v238 = vld [vmem:[%s209 + $0xc] sm:$0xf]
      %v239 = vld [vmem:[%s209 + $0x10] sm:$0xf]
      %v240 = vld [vmem:[%s209 + $0x14] sm:$0xf]
      %v247 = vunpack.c.l.b16 %v235
      %v248 = vunpack.c.l.b16 %v236
      %v249 = vunpack.c.l.b16 %v237
      %v250 = vunpack.c.l.b16 %v238
      %v251 = vunpack.c.l.b16 %v239
      %v252 = vunpack.c.l.b16 %v240
      %v253 = vpack.c.b16 %v248, %v247
      %v254 = vpack.c.b16 %v250, %v249
      %v255 = vpack.c.b16 %v252, %v251
      %v258 = vunpack.c.l.b16 %v233
      %v259 = vunpack.c.h.b16 %v233
      %v260 = vunpack.c.l.b16 %v234
      %v261 = vunpack.c.h.b16 %v234
      %v262 = vpack.c.b16 %v260, %v258
      %v263 = vpack.c.b16 %v261, %v259
      %vm266 = vcmask 130048
      %v268 = vsel %vm266, %v253, 0
      %v271 = vsel %vm266, %v254, 0
      %v274 = vsel %vm266, %v255, 0
      %276 = vmatprep.subr.bf16.mxu0 %v263
      %277 = vmatpush1.bf16.msra.mxu0 %v262
      %278 = vmatprep.subr.bf16.mxu0 0
      %279 = vmatpush1.bf16.msra.mxu0 0
      %280 = vmatprep.subr.bf16.mxu0 0
      %281 = vmatpush1.bf16.msra.mxu0 0
      %282 = vmatprep.subr.bf16.mxu0 0
      %283 = vmatpush1.bf16.msra.mxu0 0
      %284 = vmatprep.subr.bf16.mxu0 0
      %285 = vmatpush1.bf16.msra.mxu0 0
      %286 = vmatprep.subr.bf16.mxu0 0
      %287 = vmatpush1.bf16.msra.mxu0 0
      %288 = vmatprep.subr.bf16.mxu0 0
      %289 = vmatpush1.bf16.msra.mxu0 0
      %290 = vmatprep.subr.bf16.mxu0 0
      %291 = vmatpush1.bf16.msra.mxu0 0
      %292 = vmatprep.subr.bf16.mxu0 0
      %293 = vmatpush1.bf16.msra.mxu0 0
      %294 = vmatprep.subr.bf16.mxu0 0
      %295 = vmatpush1.bf16.msra.mxu0 0
      %296 = vmatprep.subr.bf16.mxu0 0
      %297 = vmatpush1.bf16.msra.mxu0 0
      %298 = vmatprep.subr.bf16.mxu0 0
      %299 = vmatpush1.bf16.msra.mxu0 0
      %300 = vmatprep.subr.bf16.mxu0 0
      %301 = vmatpush1.bf16.msra.mxu0 0
      %302 = vmatprep.subr.bf16.mxu0 0
      %303 = vmatpush1.bf16.msra.mxu0 0
      %304 = vmatprep.subr.bf16.mxu0 0
      %305 = vmatpush1.bf16.msra.mxu0 0
      %306 = vmatprep.subr.bf16.mxu0 0
      %307 = vmatpush1.bf16.msra.mxu0 0
      %308 = vmatprep.mubr.bf16.mxu0 0
      %309 = vmatmul.mubr.bf16.gmra.mrb[0].mxu0 %v268
      %v310 = vpop.f32.mrb[0].mxu0
      %v311 = vadd.f32 0.0, %v310
      %v312 = vpop.f32.mrb[0].mxu0
      %v313 = vadd.f32 0.0, %v312
      %v314 = vpop.f32.mrb[0].mxu0
      %v315 = vadd.f32 0.0, %v314
      %v316 = vpop.f32.mrb[0].mxu0
      %v317 = vadd.f32 0.0, %v316
      %318 = vmatprep.mubr.bf16.mxu0 0
      %319 = vmatmul.mubr.bf16.gmra.mrb[0].mxu0 %v271
      %v320 = vpop.f32.mrb[0].mxu0
      %v321 = vadd.f32 0.0, %v320
      %v322 = vpop.f32.mrb[0].mxu0
      %v323 = vadd.f32 0.0, %v322
      %v324 = vpop.f32.mrb[0].mxu0
      %v325 = vadd.f32 0.0, %v324
      %v326 = vpop.f32.mrb[0].mxu0
      %v327 = vadd.f32 0.0, %v326
      %328 = vmatprep.mubr.bf16.mxu0 0
      %329 = vmatmul.mubr.bf16.gmra.mrb[0].mxu0 %v274
      %v330 = vpop.f32.mrb[0].mxu0
      %v331 = vadd.f32 0.0, %v330
      %v332 = vpop.f32.mrb[0].mxu0
      %v333 = vadd.f32 0.0, %v332
      %v334 = vpop.f32.mrb[0].mxu0
      %v335 = vadd.f32 0.0, %v334
      %v336 = vpop.f32.mrb[0].mxu0
      %v337 = vadd.f32 0.0, %v336
      %338 = vdwg.mxu0
      %v339 = vld [vmem:[%s215] sm:$0xf]
      %v340 = vld [vmem:[%s215 + $0x4] sm:$0xf]
      %v341 = vld [vmem:[%s215 + $0x8] sm:$0xf]
      %v342 = vld [vmem:[%s215 + $0xc] sm:$0xf]
      %v343 = vld [vmem:[%s215 + $0x10] sm:$0xf]
      %v344 = vld [vmem:[%s215 + $0x14] sm:$0xf]
      %v351 = vunpack.c.l.b16 %v339
      %v352 = vunpack.c.l.b16 %v340
      %v353 = vunpack.c.l.b16 %v341
      %v354 = vunpack.c.l.b16 %v342
      %v355 = vunpack.c.l.b16 %v343
      %v356 = vunpack.c.l.b16 %v344
      %v357 = vpack.c.b16 %v352, %v351
      %v358 = vpack.c.b16 %v354, %v353
      %v359 = vpack.c.b16 %v356, %v355
      %v361 = vsel %vm266, %v357, 0
      %v364 = vsel %vm266, %v358, 0
      %v367 = vsel %vm266, %v359, 0
      %369 = vmatprep.subr.bf16.mxu0 %v263
      %370 = vmatpush1.bf16.msra.mxu0 %v262
      %371 = vmatprep.subr.bf16.mxu0 0
      %372 = vmatpush1.bf16.msra.mxu0 0
      %373 = vmatprep.subr.bf16.mxu0 0
      %374 = vmatpush1.bf16.msra.mxu0 0
      %375 = vmatprep.subr.bf16.mxu0 0
      %376 = vmatpush1.bf16.msra.mxu0 0
      %377 = vmatprep.subr.bf16.mxu0 0
      %378 = vmatpush1.bf16.msra.mxu0 0
      %379 = vmatprep.subr.bf16.mxu0 0
      %380 = vmatpush1.bf16.msra.mxu0 0
      %381 = vmatprep.subr.bf16.mxu0 0
      %382 = vmatpush1.bf16.msra.mxu0 0
      %383 = vmatprep.subr.bf16.mxu0 0
      %384 = vmatpush1.bf16.msra.mxu0 0
      %385 = vmatprep.subr.bf16.mxu0 0
      %386 = vmatpush1.bf16.msra.mxu0 0
      %387 = vmatprep.subr.bf16.mxu0 0
      %388 = vmatpush1.bf16.msra.mxu0 0
      %389 = vmatprep.subr.bf16.mxu0 0
      %390 = vmatpush1.bf16.msra.mxu0 0
      %391 = vmatprep.subr.bf16.mxu0 0
      %392 = vmatpush1.bf16.msra.mxu0 0
      %393 = vmatprep.subr.bf16.mxu0 0
      %394 = vmatpush1.bf16.msra.mxu0 0
      %395 = vmatprep.subr.bf16.mxu0 0
      %396 = vmatpush1.bf16.msra.mxu0 0
      %397 = vmatprep.subr.bf16.mxu0 0
      %398 = vmatpush1.bf16.msra.mxu0 0
      %399 = vmatprep.subr.bf16.mxu0 0
      %400 = vmatpush1.bf16.msra.mxu0 0
      %401 = vmatprep.mubr.bf16.mxu0 0
      %402 = vmatmul.mubr.bf16.gmra.mrb[0].mxu0 %v361
      %v403 = vpop.f32.mrb[0].mxu0
      %v404 = vadd.f32 0.0, %v403
      %v405 = vpop.f32.mrb[0].mxu0
      %v406 = vadd.f32 0.0, %v405
      %v407 = vpop.f32.mrb[0].mxu0
      %v408 = vadd.f32 0.0, %v407
      %v409 = vpop.f32.mrb[0].mxu0
      %v410 = vadd.f32 0.0, %v409
      %411 = vmatprep.mubr.bf16.mxu0 0
      %412 = vmatmul.mubr.bf16.gmra.mrb[0].mxu0 %v364
      %v413 = vpop.f32.mrb[0].mxu0
      %v414 = vadd.f32 0.0, %v413
      %v415 = vpop.f32.mrb[0].mxu0
      %v416 = vadd.f32 0.0, %v415
      %v417 = vpop.f32.mrb[0].mxu0
      %v418 = vadd.f32 0.0, %v417
      %v419 = vpop.f32.mrb[0].mxu0
      %v420 = vadd.f32 0.0, %v419
      %421 = vmatprep.mubr.bf16.mxu0 0
      %422 = vmatmul.mubr.bf16.gmra.mrb[0].mxu0 %v367
      %v423 = vpop.f32.mrb[0].mxu0
      %v424 = vadd.f32 0.0, %v423
      %v425 = vpop.f32.mrb[0].mxu0
      %v426 = vadd.f32 0.0, %v425
      %v427 = vpop.f32.mrb[0].mxu0
      %v428 = vadd.f32 0.0, %v427
      %v429 = vpop.f32.mrb[0].mxu0
      %v430 = vadd.f32 0.0, %v429
      %431 = vdwg.mxu0
      %v432 = vmul.f32 %v311, %v311
      %v433 = vmul.f32 %v315, %v315
      %v434 = vmul.f32 %v321, %v321
      %v435 = vmul.f32 %v325, %v325
      %v436 = vmul.f32 %v331, %v331
      %v437 = vmul.f32 %v335, %v335
      %v438 = vmul.f32 %v313, %v313
      %v439 = vmul.f32 %v317, %v317
      %v440 = vmul.f32 %v323, %v323
      %v441 = vmul.f32 %v327, %v327
      %v442 = vmul.f32 %v333, %v333
      %v443 = vmul.f32 %v337, %v337
      %v444 = vadd.f32 %v432, %v438
      %v445 = vadd.f32 %v433, %v439
      %v446 = vadd.f32 %v434, %v440
      %v447 = vadd.f32 %v435, %v441
      %v448 = vadd.f32 %v436, %v442
      %v449 = vadd.f32 %v437, %v443
      %v450 = vmax.f32 %v444, 1e-07
      %v451 = vmax.f32 %v445, 1e-07
      %v452 = vmax.f32 %v446, 1e-07
      %v453 = vmax.f32 %v447, 1e-07
      %v454 = vmax.f32 %v448, 1e-07
      %v455 = vmax.f32 %v449, 1e-07
      %v456 = vmul.f32 %v404, %v404
      %v457 = vmul.f32 %v408, %v408
      %v458 = vmul.f32 %v414, %v414
      %v459 = vmul.f32 %v418, %v418
      %v460 = vmul.f32 %v424, %v424
      %v461 = vmul.f32 %v428, %v428
      %v462 = vmul.f32 %v406, %v406
      %v463 = vmul.f32 %v410, %v410
      %v464 = vmul.f32 %v416, %v416
      %v465 = vmul.f32 %v420, %v420
      %v466 = vmul.f32 %v426, %v426
      %v467 = vmul.f32 %v430, %v430
      %v468 = vadd.f32 %v456, %v462
      %v469 = vadd.f32 %v457, %v463
      %v470 = vadd.f32 %v458, %v464
      %v471 = vadd.f32 %v459, %v465
      %v472 = vadd.f32 %v460, %v466
      %v473 = vadd.f32 %v461, %v467
      %v474 = vmax.f32 %v468, 1e-07
      %v475 = vmax.f32 %v469, 1e-07
      %v476 = vmax.f32 %v470, 1e-07
      %v477 = vmax.f32 %v471, 1e-07
      %v478 = vmax.f32 %v472, 1e-07
      %v479 = vmax.f32 %v473, 1e-07
      %v480 = vadd.f32 %v450, %v474
      %v481 = vadd.f32 %v451, %v475
      %v482 = vadd.f32 %v452, %v476
      %v483 = vadd.f32 %v453, %v477
      %v484 = vadd.f32 %v454, %v478
      %v485 = vadd.f32 %v455, %v479
      %v486 = vmul.f32 %v450, %v474
      %v487 = vmul.f32 %v451, %v475
      %v488 = vmul.f32 %v452, %v476
      %v489 = vmul.f32 %v453, %v477
      %v490 = vmul.f32 %v454, %v478
      %v491 = vmul.f32 %v455, %v479
      %v492 = vrsqrt.pop %v486
      %v493 = vmul.f32 %v486, %v492
      %vm494 = vcmp.eq.f32.partialorder %v486, inf
      %v495 = vsel %vm494, %v486, %v493
      %vm496 = vcmp.eq.f32.partialorder %v486, 0.0
      %v497 = vand.u32 %v486, 2147483648
      %v498 = vsel %vm496, %v497, %v495
      %v499 = vrsqrt.pop %v487
      %v500 = vmul.f32 %v487, %v499
      %vm501 = vcmp.eq.f32.partialorder %v487, inf
      %v502 = vsel %vm501, %v487, %v500
      %vm503 = vcmp.eq.f32.partialorder %v487, 0.0
      %v504 = vand.u32 %v487, 2147483648
      %v505 = vsel %vm503, %v504, %v502
      %v506 = vrsqrt.pop %v488
      %v507 = vmul.f32 %v488, %v506
      %vm508 = vcmp.eq.f32.partialorder %v488, inf
      %v509 = vsel %vm508, %v488, %v507
      %vm510 = vcmp.eq.f32.partialorder %v488, 0.0
      %v511 = vand.u32 %v488, 2147483648
      %v512 = vsel %vm510, %v511, %v509
      %v513 = vrsqrt.pop %v489
      %v514 = vmul.f32 %v489, %v513
      %vm515 = vcmp.eq.f32.partialorder %v489, inf
      %v516 = vsel %vm515, %v489, %v514
      %vm517 = vcmp.eq.f32.partialorder %v489, 0.0
      %v518 = vand.u32 %v489, 2147483648
      %v519 = vsel %vm517, %v518, %v516
      %v520 = vrsqrt.pop %v490
      %v521 = vmul.f32 %v490, %v520
      %vm522 = vcmp.eq.f32.partialorder %v490, inf
      %v523 = vsel %vm522, %v490, %v521
      %vm524 = vcmp.eq.f32.partialorder %v490, 0.0
      %v525 = vand.u32 %v490, 2147483648
      %v526 = vsel %vm524, %v525, %v523
      %v527 = vrsqrt.pop %v491
      %v528 = vmul.f32 %v491, %v527
      %vm529 = vcmp.eq.f32.partialorder %v491, inf
      %v530 = vsel %vm529, %v491, %v528
      %vm531 = vcmp.eq.f32.partialorder %v491, 0.0
      %v532 = vand.u32 %v491, 2147483648
      %v533 = vsel %vm531, %v532, %v530
      %v534 = vmul.f32 %v498, 2.0
      %v535 = vmul.f32 %v505, 2.0
      %v536 = vmul.f32 %v512, 2.0
      %v537 = vmul.f32 %v519, 2.0
      %v538 = vmul.f32 %v526, 2.0
      %v539 = vmul.f32 %v533, 2.0
      %v540 = vsub.f32 %v480, %v534
      %v541 = vsub.f32 %v481, %v535
      %v542 = vsub.f32 %v482, %v536
      %v543 = vsub.f32 %v483, %v537
      %v544 = vsub.f32 %v484, %v538
      %v545 = vsub.f32 %v485, %v539
      %v546 = vmax.f32 %v540, 0.0
      %v547 = vmax.f32 %v541, 0.0
      %v548 = vmax.f32 %v542, 0.0
      %v549 = vmax.f32 %v543, 0.0
      %v550 = vmax.f32 %v544, 0.0
      %v551 = vmax.f32 %v545, 0.0
      %v552 = vadd.f32 %v546, %v547
      %v553 = vadd.f32 %v552, %v548
      %v554 = vadd.f32 %v553, %v549
      %v555 = vadd.f32 %v554, %v550
      %v556 = vadd.f32 %v555, %v551
      %557 = vadd.xlane.f32.xlu0 %v556
      %v558 = vpop.xlane.xlu0 %557
      %v559 = vrot.slane %v558, 4
      %v560 = vadd.f32 %v558, %v559
      %v561 = vrot.slane %v560, 2
      %v562 = vadd.f32 %v560, %v561
      %v563 = vrot.slane %v562, 1
      %v564 = vadd.f32 %v562, %v563
      %s565 = vtos %v564
      %v566 = vlog2.pop %v474
      %v567 = vmul.f32 %v566, 0.6931472
      %v568 = vlog2.pop %v475
      %v569 = vmul.f32 %v568, 0.6931472
      %v570 = vlog2.pop %v476
      %v571 = vmul.f32 %v570, 0.6931472
      %v572 = vlog2.pop %v477
      %v573 = vmul.f32 %v572, 0.6931472
      %v574 = vlog2.pop %v478
      %v575 = vmul.f32 %v574, 0.6931472
      %v576 = vlog2.pop %v479
      %v577 = vmul.f32 %v576, 0.6931472
      %v578 = vlog2.pop %v450
      %v579 = vmul.f32 %v578, 0.6931472
      %v580 = vlog2.pop %v451
      %v581 = vmul.f32 %v580, 0.6931472
      %v582 = vlog2.pop %v452
      %v583 = vmul.f32 %v582, 0.6931472
      %v584 = vlog2.pop %v453
      %v585 = vmul.f32 %v584, 0.6931472
      %v586 = vlog2.pop %v454
      %v587 = vmul.f32 %v586, 0.6931472
      %v588 = vlog2.pop %v455
      %v589 = vmul.f32 %v588, 0.6931472
      %v590 = vsub.f32 %v567, %v579
      %v591 = vsub.f32 %v569, %v581
      %v592 = vsub.f32 %v571, %v583
      %v593 = vsub.f32 %v573, %v585
      %v594 = vsub.f32 %v575, %v587
      %v595 = vsub.f32 %v577, %v589
      %v596 = vand.u32 2147483647, %v590
      %v597 = vand.u32 2147483647, %v591
      %v598 = vand.u32 2147483647, %v592
      %v599 = vand.u32 2147483647, %v593
      %v600 = vand.u32 2147483647, %v594
      %v601 = vand.u32 2147483647, %v595
      %v602 = vadd.f32 %v596, %v597
      %v603 = vadd.f32 %v602, %v598
      %v604 = vadd.f32 %v603, %v599
      %v605 = vadd.f32 %v604, %v600
      %v606 = vadd.f32 %v605, %v601
      %607 = vadd.xlane.f32.xlu0 %v606
      %v608 = vpop.xlane.xlu0 %607
      %v609 = vrot.slane %v608, 4
      %v610 = vadd.f32 %v608, %v609
      %v611 = vrot.slane %v610, 2
      %v612 = vadd.f32 %v610, %v611
      %v613 = vrot.slane %v612, 1
      %v614 = vadd.f32 %v612, %v613
      %s615 = vtos %v614
      %s616 = smul.f32 %s615, 0.5
      %s617 = smul.u32 %s19, 128
      %v618 = vlaneseq
      %v619 = vand.u32 %v618, 127
      %v620 = vstv %s617
      %v621 = vadd.s32 %v620, %v619
      %vm622 = vcmp.lt.s32.totalorder %v621, 9
      %v623 = vsel %vm622, 1, 0
      %vm624 = vcmp.eq.s32.totalorder %v623, 1
      %v625 = vsel %vm624, %v474, 0.0
      %v626 = vsel %vm624, %v475, 0.0
      %v627 = vsel %vm624, %v476, 0.0
      %v628 = vsel %vm624, %v477, 0.0
      %v629 = vsel %vm624, %v478, 0.0
      %v630 = vsel %vm624, %v479, 0.0
      %v631 = vadd.f32 %v625, %v626
      %v632 = vadd.f32 %v631, %v627
      %v633 = vadd.f32 %v632, %v628
      %v634 = vadd.f32 %v633, %v629
      %v635 = vadd.f32 %v634, %v630
      %636 = vadd.xlane.f32.xlu0 %v635
      %v637 = vpop.xlane.xlu0 %636
      %v638 = vrot.slane %v637, 4
      %v639 = vadd.f32 %v637, %v638
      %v640 = vrot.slane %v639, 2
      %v641 = vadd.f32 %v639, %v640
      %v642 = vrot.slane %v641, 1
      %v643 = vadd.f32 %v641, %v642
      %s644 = vtos %v643
      %v645 = vld [vmem:[%s226] sm:$0xff]
      %vm646 = vcmp.eq.s32.totalorder %v619, 0
      %vm647 = vcmp.eq.s32.totalorder %v619, 1
      %vm648 = vcmp.eq.s32.totalorder %v619, 2
      %v649 = vstv %s616
      %v650 = vsel %vm648, %v649, 0.0
      %v651 = vstv %s644
      %v652 = vsel %vm647, %v651, %v650
      %v653 = vstv %s565
      %v654 = vsel %vm646, %v653, %v652
      %v655 = vadd.f32 %v645, %v654
      %656 = vst [vmem:[%s226] sm:$0xff] %v655
      %p657 = scmp.lt.s32.totalorder %s18, 1
      %s658 = scalar_select %p657, %s18, 1
      %s659 = smul.addr %s658, 8
      %s660 = scalar_lea.vmem %s3, %s659
      // Predicated region
      $region37: #{loss.3} parent=31 // pred_check
        %p661 = pneg %p122
      $region38: #{loss.3} parent=31 // pred_check_branch
        %663 = sbr.rel (%p661) target = $region40
      $region39: #{loss.3} parent=31 // pred_region
        _
      $region40: #{loss.3} parent=31 // pred_fallthru
        _
    $region32: #{loss.3} parent=5 // pred_fallthru
      _
    %p664 = scmp.le.s32.totalorder 2, %s9
    // Predicated region
    $region41: #{loss.3} parent=5 // pred_check
      %p665 = pneg %p664
    $region42: #{loss.3} parent=5 // pred_check_branch
      %667 = sbr.rel (%p665) target = $region44
    $region43: #{loss.3} parent=5 // pred_region
      %s668 = ssub.s32 %s9, 2
      // Predicated region
      $region45: #{loss.3} parent=43 // pred_check
        %p669 = pneg %p128
      $region46: #{loss.3} parent=43 // pred_check_branch
        %671 = sbr.rel (%p669) target = $region48
      $region47: #{loss.3} parent=43 // pred_region
        %p672 = scmp.lt.s32.totalorder %s20, 1
        %s673 = scalar_select %p672, %s20, 1
        %s674 = smul.addr %s673, 8
        %s675 = scalar_lea.vmem %s3, %s674
      $region48: #{loss.3} parent=43 // pred_fallthru
        _
    $region44: #{loss.3} parent=5 // pred_fallthru
      _
  $region6: #{loss.3} parent=0 // loop_footer
    %s13 = sadd.s32 1, %s9
  $region7: #{loss.3} parent=0 // loop_footer_branch
    %8 = sbr.rel target = $region3
  $region8: #{loss.3} parent=0 // loop_exit
    _

// kernel: loss.4
$region0: #{loss.4}
  #allocation0 [shape = 'u32[]', space=smem, size = 0x4, offset = 0x4, fixed_abs, tag = 'smem constant byte address 0x4 - core index']
  #allocation1 [shape = 'u32[144,128]{1,0:T(1,128)}', space=vmem, size = 0x12000, scoped, tag = 'internal scratch']
  %s0 = inlined_call_operand.vmem [shape: bf16[64,32], index: 0, kind: input, shape index: {}]
  %s1 = inlined_call_operand.vmem [shape: bf16[64,32], index: 1, kind: input, shape index: {}]
  %s2 = inlined_call_operand.vmem [shape: bf16[32,256], index: 2, kind: input, shape index: {}]
  %s3 = inlined_call_operand.vmem [shape: f32[2,8,128], index: 3, kind: output, shape index: {}]
  %s4 = sld [smem:[#allocation0]]
  $region49: #{loss.4} parent=0
    _
  %s6 = ssub.s32 1, %s4
  %s7 = scalar_select 0, %s6, %s4
  loop: start=0, step=1, limit=4
  $region2: #{loss.4} parent=0 // loop_pre_header
    _
  $region3: #{loss.4} parent=0 // loop_header
    %s9 = sphi 0, %s13
    %p10 = scmp.ge.s32.totalorder %s9, 4
    %s16 = sphi 0, %s28
    %s17 = sphi 0, %s24
    %s18 = sphi 0, %s16
    %s19 = sphi 0, %s17
    %s20 = sphi 0, %s18
    %s21 = sphi 0, %s19
    %s31 = sphi 0, %s33
    %s34 = sphi 0, %s31
    %s35 = sphi 0, %s34
    %s51 = sphi 0, %s35
    %s57 = sphi 0, %s59
    %s60 = sphi 0, %s57
    %s61 = sphi 0, %s60
    %s77 = sphi 0, %s61
    %s83 = sphi 0, %s85
    %s86 = sphi 0, %s83
    %s87 = sphi 0, %s86
    %s103 = sphi 0, %s87
    %s109 = sphi 0, %s111
    %s112 = sphi 0, %s109
    %s113 = sphi 0, %s112
    %s129 = sphi 0, %s113
  $region4: #{loss.4} parent=0 // loop_header_branch
    %12 = sbr.rel (%p10) target = $region8
  $region5: #{loss.4} parent=0 // loop_body
    %s14 = ssub.s32 %s9, 1
    %s15 = ssub.s32 %s9, 2
    %s22 = sadd.s32 1, %s17
    %p23 = scmp.ge.s32.totalorder %s22, 1
    %s24 = scalar_select %p23, 0, %s22
    %s25 = sadd.s32 1, %s16
    %s26 = scalar_select %p23, %s25, %s16
    %p27 = scmp.ge.s32.totalorder %s26, 2
    %s28 = scalar_select %p27, 0, %s26
    %s29 = ssub.s32 %s16, %s28
    %p30 = scmp.eq.s32.totalorder %s29, 0
    %s32 = sadd.s32 %s31, 1
    %s33 = scalar_select %p30, %s31, %s32
    %p36 = pneg %p30
    %p37 = scmp.eq.s32.totalorder %s9, 1
    %p38 = por %p36, %p37
    %p39 = scmp.ne.s32.totalorder %s31, %s34
    %p40 = scmp.eq.s32.totalorder %s9, 0
    %p41 = por %p39, %p40
    %p42 = scmp.ne.s32.totalorder %s31, %s34
    %p43 = scmp.eq.s32.totalorder %s14, 1
    %p44 = por %p42, %p43
    %p45 = scmp.ne.s32.totalorder %s34, %s35
    %p46 = scmp.eq.s32.totalorder %s14, 0
    %p47 = por %p45, %p46
    %p48 = scmp.ne.s32.totalorder %s34, %s35
    %p49 = scmp.eq.s32.totalorder %s15, 1
    %p50 = por %p48, %p49
    %p52 = scmp.ne.s32.totalorder %s35, %s51
    %p53 = scmp.eq.s32.totalorder %s15, 0
    %p54 = por %p52, %p53
    %s55 = ssub.s32 %s16, %s28
    %p56 = scmp.eq.s32.totalorder %s55, 0
    %s58 = sadd.s32 %s57, 1
    %s59 = scalar_select %p56, %s57, %s58
    %p62 = pneg %p56
    %p63 = scmp.eq.s32.totalorder %s9, 1
    %p64 = por %p62, %p63
    %p65 = scmp.ne.s32.totalorder %s57, %s60
    %p66 = scmp.eq.s32.totalorder %s9, 0
    %p67 = por %p65, %p66
    %p68 = scmp.ne.s32.totalorder %s57, %s60
    %p69 = scmp.eq.s32.totalorder %s14, 1
    %p70 = por %p68, %p69
    %p71 = scmp.ne.s32.totalorder %s60, %s61
    %p72 = scmp.eq.s32.totalorder %s14, 0
    %p73 = por %p71, %p72
    %p74 = scmp.ne.s32.totalorder %s60, %s61
    %p75 = scmp.eq.s32.totalorder %s15, 1
    %p76 = por %p74, %p75
    %p78 = scmp.ne.s32.totalorder %s61, %s77
    %p79 = scmp.eq.s32.totalorder %s15, 0
    %p80 = por %p78, %p79
    %s81 = ssub.s32 %s17, %s24
    %p82 = scmp.eq.s32.totalorder %s81, 0
    %s84 = sadd.s32 %s83, 1
    %s85 = scalar_select %p82, %s83, %s84
    %p88 = pneg %p82
    %p89 = scmp.eq.s32.totalorder %s9, 1
    %p90 = por %p88, %p89
    %p91 = scmp.ne.s32.totalorder %s83, %s86
    %p92 = scmp.eq.s32.totalorder %s9, 0
    %p93 = por %p91, %p92
    %p94 = scmp.ne.s32.totalorder %s83, %s86
    %p95 = scmp.eq.s32.totalorder %s14, 1
    %p96 = por %p94, %p95
    %p97 = scmp.ne.s32.totalorder %s86, %s87
    %p98 = scmp.eq.s32.totalorder %s14, 0
    %p99 = por %p97, %p98
    %p100 = scmp.ne.s32.totalorder %s86, %s87
    %p101 = scmp.eq.s32.totalorder %s15, 1
    %p102 = por %p100, %p101
    %p104 = scmp.ne.s32.totalorder %s87, %s103
    %p105 = scmp.eq.s32.totalorder %s15, 0
    %p106 = por %p104, %p105
    %s107 = ssub.s32 %s16, %s28
    %p108 = scmp.eq.s32.totalorder %s107, 0
    %s110 = sadd.s32 %s109, 1
    %s111 = scalar_select %p108, %s109, %s110
    %p114 = pneg %p108
    %p115 = scmp.eq.s32.totalorder %s9, 1
    %p116 = por %p114, %p115
    %p117 = scmp.ne.s32.totalorder %s109, %s112
    %p118 = scmp.eq.s32.totalorder %s9, 0
    %p119 = por %p117, %p118
    %p120 = scmp.ne.s32.totalorder %s109, %s112
    %p121 = scmp.eq.s32.totalorder %s14, 1
    %p122 = por %p120, %p121
    %p123 = scmp.ne.s32.totalorder %s112, %s113
    %p124 = scmp.eq.s32.totalorder %s14, 0
    %p125 = por %p123, %p124
    %p126 = scmp.ne.s32.totalorder %s112, %s113
    %p127 = scmp.eq.s32.totalorder %s15, 1
    %p128 = por %p126, %p127
    %p130 = scmp.ne.s32.totalorder %s113, %s129
    %p131 = scmp.eq.s32.totalorder %s15, 0
    %p132 = por %p130, %p131
    %p133 = scmp.le.s32.totalorder 1, %s9
    %p134 = scmp.lt.s32.totalorder %s9, 3
    %p135 = pnand %p133, %p134
    %p136 = pneg %p135
    // Predicated region
    $region9: #{loss.4} parent=5 // pred_check
      _
    $region10: #{loss.4} parent=5 // pred_check_branch
      %138 = sbr.rel (%p135) target = $region12
    $region11: #{loss.4} parent=5 // pred_region
      %s139 = ssub.s32 %s9, 1
      // Predicated region
      $region13: #{loss.4} parent=11 // pred_check
        %p140 = pneg %p99
      $region14: #{loss.4} parent=11 // pred_check_branch
        %142 = sbr.rel (%p140) target = $region16
      $region15: #{loss.4} parent=11 // pred_region
        %s143 = smul.u32 2, %s19
        %p144 = scmp.lt.s32.totalorder %s143, 1
        %s145 = scalar_select %p144, %s143, 1
        %s146 = smul.addr %s145, 4
        %s147 = scalar_lea.vmem %s2, %s146
        %s148 = smul.u32 2, %s19
      $region16: #{loss.4} parent=11 // pred_fallthru
        _
    $region12: #{loss.4} parent=5 // pred_fallthru
      _
    %p149 = scmp.lt.s32.totalorder %s9, 2
    // Predicated region
    $region17: #{loss.4} parent=5 // pred_check
      %p150 = pneg %p149
    $region18: #{loss.4} parent=5 // pred_check_branch
      %152 = sbr.rel (%p150) target = $region20
    $region19: #{loss.4} parent=5 // pred_region
      // Predicated region
      $region21: #{loss.4} parent=19 // pred_check
        %p153 = pneg %p41
      $region22: #{loss.4} parent=19 // pred_check_branch
        %155 = sbr.rel (%p153) target = $region24
      $region23: #{loss.4} parent=19 // pred_region
        %s156 = smul.u32 4, %s16
        %p157 = scmp.lt.s32.totalorder %s156, 7
        %s158 = scalar_select %p157, %s156, 7
        %s159 = smul.addr %s158, 4
        %s160 = scalar_lea.vmem %s0, %s159
        %s161 = smul.u32 4, %s16
      $region24: #{loss.4} parent=19 // pred_fallthru
        _
      // Predicated region
      $region25: #{loss.4} parent=19 // pred_check
        %p162 = pneg %p67
      $region26: #{loss.4} parent=19 // pred_check_branch
        %164 = sbr.rel (%p162) target = $region28
      $region27: #{loss.4} parent=19 // pred_region
        %s165 = smul.u32 4, %s16
        %p166 = scmp.lt.s32.totalorder %s165, 7
        %s167 = scalar_select %p166, %s165, 7
        %s168 = smul.addr %s167, 4
        %s169 = scalar_lea.vmem %s1, %s168
        %s170 = smul.u32 4, %s16
      $region28: #{loss.4} parent=19 // pred_fallthru
        _
    $region20: #{loss.4} parent=5 // pred_fallthru
      _
    %p171 = scmp.le.s32.totalorder 1, %s9
    %p172 = scmp.lt.s32.totalorder %s9, 3
    %p173 = pnand %p171, %p172
    %p174 = pneg %p173
    // Predicated region
    $region29: #{loss.4} parent=5 // pred_check
      _
    $region30: #{loss.4} parent=5 // pred_check_branch
      %176 = sbr.rel (%p173) target = $region32
    $region31: #{loss.4} parent=5 // pred_region
      %s177 = ssub.s32 %s9, 1
      %s178 = smul.u32 4, %s18
      %p179 = scmp.lt.s32.totalorder %s178, 7
      %s180 = scalar_select %p179, %s178, 7
      %s181 = smul.addr %s180, 4
      %s182 = scalar_lea.vmem %s0, %s181
      %p183 = pneg %p47
      %p184 = pneg %p44
      %s185 = smul.u32 4, %s18
      %p186 = scmp.lt.s32.totalorder %s185, 7
      %s187 = scalar_select %p186, %s185, 7
      %s188 = smul.addr %s187, 4
      %s189 = scalar_lea.vmem %s1, %s188
      %p190 = pneg %p73
      %p191 = pneg %p70
      %s192 = smul.u32 2, %s19
      %p193 = scmp.lt.s32.totalorder %s192, 1
      %s194 = scalar_select %p193, %s192, 1
      %s195 = smul.addr %s194, 4
      %s196 = scalar_lea.vmem %s2, %s195
      %p197 = pneg %p99
      %p198 = pneg %p96
      %p199 = pneg %p125
      %p200 = pneg %p122
      %p201 = scmp.lt.s32.totalorder %s18, 1
      %s202 = scalar_select %p201, %s18, 1
      %s203 = smul.addr %s202, 8
      %s204 = scalar_lea.vmem %s3, %s203
      %s205 = smul.u32 4, %s18
      %p206 = scmp.lt.s32.totalorder %s205, 7
      %s207 = scalar_select %p206, %s205, 7
      %s208 = smul.addr %s207, 4
      %s209 = scalar_lea.vmem %s0, %s208
      %s210 = smul.u32 4, %s18
      %s211 = smul.u32 4, %s18
      %p212 = scmp.lt.s32.totalorder %s211, 7
      %s213 = scalar_select %p212, %s211, 7
      %s214 = smul.addr %s213, 4
      %s215 = scalar_lea.vmem %s1, %s214
      %s216 = smul.u32 4, %s18
      %s217 = smul.u32 2, %s19
      %p218 = scmp.lt.s32.totalorder %s217, 1
      %s219 = scalar_select %p218, %s217, 1
      %s220 = smul.addr %s219, 4
      %s221 = scalar_lea.vmem %s2, %s220
      %s222 = smul.u32 2, %s19
      %p223 = scmp.lt.s32.totalorder %s18, 1
      %s224 = scalar_select %p223, %s18, 1
      %s225 = smul.addr %s224, 8
      %s226 = scalar_lea.vmem %s3, %s225
      %p228 = scmp.eq.s32.totalorder %s19, 0
      // Predicated region
      $region33: #{loss.4} parent=31 // pred_check
        %p229 = pneg %p228
      $region34: #{loss.4} parent=31 // pred_check_branch
        %231 = sbr.rel (%p229) target = $region36
      $region35: #{loss.4} parent=31 // pred_region
        %232 = vst [vmem:[%s226] sm:$0xff] 0.0
      $region36: #{loss.4} parent=31 // pred_fallthru
        _
      %v233 = vld [vmem:[%s221] sm:$0xff]
      %v234 = vld [vmem:[%s221 + $0x8] sm:$0xff]
      %v235 = vld [vmem:[%s221 + $0x10] sm:$0xff]
      %v236 = vld [vmem:[%s221 + $0x18] sm:$0xff]
      %v237 = vld [vmem:[%s209] sm:$0xf]
      %v238 = vld [vmem:[%s209 + $0x4] sm:$0xf]
      %v239 = vld [vmem:[%s209 + $0x8] sm:$0xf]
      %v240 = vld [vmem:[%s209 + $0xc] sm:$0xf]
      %v245 = vunpack.c.l.b16 %v237
      %v246 = vunpack.c.l.b16 %v238
      %v247 = vunpack.c.l.b16 %v239
      %v248 = vunpack.c.l.b16 %v240
      %v249 = vpack.c.b16 %v246, %v245
      %v250 = vpack.c.b16 %v248, %v247
      %v255 = vunpack.c.l.b16 %v233
      %v256 = vunpack.c.h.b16 %v233
      %v257 = vunpack.c.l.b16 %v234
      %v258 = vunpack.c.h.b16 %v234
      %v259 = vunpack.c.l.b16 %v235
      %v260 = vunpack.c.h.b16 %v235
      %v261 = vunpack.c.l.b16 %v236
      %v262 = vunpack.c.h.b16 %v236
      %v263 = vpack.c.b16 %v257, %v255
      %v264 = vpack.c.b16 %v258, %v256
      %v265 = vpack.c.b16 %v261, %v259
      %v266 = vpack.c.b16 %v262, %v260
      %vm271 = vcmask 261120
      %v273 = vsel %vm271, %v249, 0
      %v276 = vsel %vm271, %v250, 0
      %278 = vmatprep.subr.bf16.mxu0 %v264
      %279 = vmatpush1.bf16.msra.mxu0 %v263
      %280 = vmatprep.subr.bf16.mxu0 %v266
      %281 = vmatpush1.bf16.msra.mxu0 %v265
      %282 = vmatprep.subr.bf16.mxu0 0
      %283 = vmatpush1.bf16.msra.mxu0 0
      %284 = vmatprep.subr.bf16.mxu0 0
      %285 = vmatpush1.bf16.msra.mxu0 0
      %286 = vmatprep.subr.bf16.mxu0 0
      %287 = vmatpush1.bf16.msra.mxu0 0
      %288 = vmatprep.subr.bf16.mxu0 0
      %289 = vmatpush1.bf16.msra.mxu0 0
      %290 = vmatprep.subr.bf16.mxu0 0
      %291 = vmatpush1.bf16.msra.mxu0 0
      %292 = vmatprep.subr.bf16.mxu0 0
      %293 = vmatpush1.bf16.msra.mxu0 0
      %294 = vmatprep.subr.bf16.mxu0 0
      %295 = vmatpush1.bf16.msra.mxu0 0
      %296 = vmatprep.subr.bf16.mxu0 0
      %297 = vmatpush1.bf16.msra.mxu0 0
      %298 = vmatprep.subr.bf16.mxu0 0
      %299 = vmatpush1.bf16.msra.mxu0 0
      %300 = vmatprep.subr.bf16.mxu0 0
      %301 = vmatpush1.bf16.msra.mxu0 0
      %302 = vmatprep.subr.bf16.mxu0 0
      %303 = vmatpush1.bf16.msra.mxu0 0
      %304 = vmatprep.subr.bf16.mxu0 0
      %305 = vmatpush1.bf16.msra.mxu0 0
      %306 = vmatprep.subr.bf16.mxu0 0
      %307 = vmatpush1.bf16.msra.mxu0 0
      %308 = vmatprep.subr.bf16.mxu0 0
      %309 = vmatpush1.bf16.msra.mxu0 0
      %310 = vmatprep.mubr.bf16.mxu0 0
      %311 = vmatmul.mubr.bf16.gmra.mrb[0].mxu0 %v273
      %v312 = vpop.f32.mrb[0].mxu0
      %v313 = vadd.f32 0.0, %v312
      %v314 = vpop.f32.mrb[0].mxu0
      %v315 = vadd.f32 0.0, %v314
      %v316 = vpop.f32.mrb[0].mxu0
      %v317 = vadd.f32 0.0, %v316
      %v318 = vpop.f32.mrb[0].mxu0
      %v319 = vadd.f32 0.0, %v318
      %320 = vmatprep.mubr.bf16.mxu0 0
      %321 = vmatmul.mubr.bf16.gmra.mrb[0].mxu0 %v276
      %v322 = vpop.f32.mrb[0].mxu0
      %v323 = vadd.f32 0.0, %v322
      %v324 = vpop.f32.mrb[0].mxu0
      %v325 = vadd.f32 0.0, %v324
      %v326 = vpop.f32.mrb[0].mxu0
      %v327 = vadd.f32 0.0, %v326
      %v328 = vpop.f32.mrb[0].mxu0
      %v329 = vadd.f32 0.0, %v328
      %330 = vdwg.mxu0
      %v331 = vld [vmem:[%s215] sm:$0xf]
      %v332 = vld [vmem:[%s215 + $0x4] sm:$0xf]
      %v333 = vld [vmem:[%s215 + $0x8] sm:$0xf]
      %v334 = vld [vmem:[%s215 + $0xc] sm:$0xf]
      %v339 = vunpack.c.l.b16 %v331
      %v340 = vunpack.c.l.b16 %v332
      %v341 = vunpack.c.l.b16 %v333
      %v342 = vunpack.c.l.b16 %v334
      %v343 = vpack.c.b16 %v340, %v339
      %v344 = vpack.c.b16 %v342, %v341
      %v346 = vsel %vm271, %v343, 0
      %v349 = vsel %vm271, %v344, 0
      %351 = vmatprep.subr.bf16.mxu0 %v264
      %352 = vmatpush1.bf16.msra.mxu0 %v263
      %353 = vmatprep.subr.bf16.mxu0 %v266
      %354 = vmatpush1.bf16.msra.mxu0 %v265
      %355 = vmatprep.subr.bf16.mxu0 0
      %356 = vmatpush1.bf16.msra.mxu0 0
      %357 = vmatprep.subr.bf16.mxu0 0
      %358 = vmatpush1.bf16.msra.mxu0 0
      %359 = vmatprep.subr.bf16.mxu0 0
      %360 = vmatpush1.bf16.msra.mxu0 0
      %361 = vmatprep.subr.bf16.mxu0 0
      %362 = vmatpush1.bf16.msra.mxu0 0
      %363 = vmatprep.subr.bf16.mxu0 0
      %364 = vmatpush1.bf16.msra.mxu0 0
      %365 = vmatprep.subr.bf16.mxu0 0
      %366 = vmatpush1.bf16.msra.mxu0 0
      %367 = vmatprep.subr.bf16.mxu0 0
      %368 = vmatpush1.bf16.msra.mxu0 0
      %369 = vmatprep.subr.bf16.mxu0 0
      %370 = vmatpush1.bf16.msra.mxu0 0
      %371 = vmatprep.subr.bf16.mxu0 0
      %372 = vmatpush1.bf16.msra.mxu0 0
      %373 = vmatprep.subr.bf16.mxu0 0
      %374 = vmatpush1.bf16.msra.mxu0 0
      %375 = vmatprep.subr.bf16.mxu0 0
      %376 = vmatpush1.bf16.msra.mxu0 0
      %377 = vmatprep.subr.bf16.mxu0 0
      %378 = vmatpush1.bf16.msra.mxu0 0
      %379 = vmatprep.subr.bf16.mxu0 0
      %380 = vmatpush1.bf16.msra.mxu0 0
      %381 = vmatprep.subr.bf16.mxu0 0
      %382 = vmatpush1.bf16.msra.mxu0 0
      %383 = vmatprep.mubr.bf16.mxu0 0
      %384 = vmatmul.mubr.bf16.gmra.mrb[0].mxu0 %v346
      %v385 = vpop.f32.mrb[0].mxu0
      %v386 = vadd.f32 0.0, %v385
      %v387 = vpop.f32.mrb[0].mxu0
      %v388 = vadd.f32 0.0, %v387
      %v389 = vpop.f32.mrb[0].mxu0
      %v390 = vadd.f32 0.0, %v389
      %v391 = vpop.f32.mrb[0].mxu0
      %v392 = vadd.f32 0.0, %v391
      %393 = vmatprep.mubr.bf16.mxu0 0
      %394 = vmatmul.mubr.bf16.gmra.mrb[0].mxu0 %v349
      %v395 = vpop.f32.mrb[0].mxu0
      %v396 = vadd.f32 0.0, %v395
      %v397 = vpop.f32.mrb[0].mxu0
      %v398 = vadd.f32 0.0, %v397
      %v399 = vpop.f32.mrb[0].mxu0
      %v400 = vadd.f32 0.0, %v399
      %v401 = vpop.f32.mrb[0].mxu0
      %v402 = vadd.f32 0.0, %v401
      %403 = vdwg.mxu0
      %v404 = vmul.f32 %v313, %v313
      %v405 = vmul.f32 %v317, %v317
      %v406 = vmul.f32 %v323, %v323
      %v407 = vmul.f32 %v327, %v327
      %v408 = vmul.f32 %v315, %v315
      %v409 = vmul.f32 %v319, %v319
      %v410 = vmul.f32 %v325, %v325
      %v411 = vmul.f32 %v329, %v329
      %v412 = vadd.f32 %v404, %v408
      %v413 = vadd.f32 %v405, %v409
      %v414 = vadd.f32 %v406, %v410
      %v415 = vadd.f32 %v407, %v411
      %v416 = vmax.f32 %v412, 1e-07
      %v417 = vmax.f32 %v413, 1e-07
      %v418 = vmax.f32 %v414, 1e-07
      %v419 = vmax.f32 %v415, 1e-07
      %v420 = vmul.f32 %v386, %v386
      %v421 = vmul.f32 %v390, %v390
      %v422 = vmul.f32 %v396, %v396
      %v423 = vmul.f32 %v400, %v400
      %v424 = vmul.f32 %v388, %v388
      %v425 = vmul.f32 %v392, %v392
      %v426 = vmul.f32 %v398, %v398
      %v427 = vmul.f32 %v402, %v402
      %v428 = vadd.f32 %v420, %v424
      %v429 = vadd.f32 %v421, %v425
      %v430 = vadd.f32 %v422, %v426
      %v431 = vadd.f32 %v423, %v427
      %v432 = vmax.f32 %v428, 1e-07
      %v433 = vmax.f32 %v429, 1e-07
      %v434 = vmax.f32 %v430, 1e-07
      %v435 = vmax.f32 %v431, 1e-07
      %v436 = vadd.f32 %v416, %v432
      %v437 = vadd.f32 %v417, %v433
      %v438 = vadd.f32 %v418, %v434
      %v439 = vadd.f32 %v419, %v435
      %v440 = vmul.f32 %v416, %v432
      %v441 = vmul.f32 %v417, %v433
      %v442 = vmul.f32 %v418, %v434
      %v443 = vmul.f32 %v419, %v435
      %v444 = vrsqrt.pop %v440
      %v445 = vmul.f32 %v440, %v444
      %vm446 = vcmp.eq.f32.partialorder %v440, inf
      %v447 = vsel %vm446, %v440, %v445
      %vm448 = vcmp.eq.f32.partialorder %v440, 0.0
      %v449 = vand.u32 %v440, 2147483648
      %v450 = vsel %vm448, %v449, %v447
      %v451 = vrsqrt.pop %v441
      %v452 = vmul.f32 %v441, %v451
      %vm453 = vcmp.eq.f32.partialorder %v441, inf
      %v454 = vsel %vm453, %v441, %v452
      %vm455 = vcmp.eq.f32.partialorder %v441, 0.0
      %v456 = vand.u32 %v441, 2147483648
      %v457 = vsel %vm455, %v456, %v454
      %v458 = vrsqrt.pop %v442
      %v459 = vmul.f32 %v442, %v458
      %vm460 = vcmp.eq.f32.partialorder %v442, inf
      %v461 = vsel %vm460, %v442, %v459
      %vm462 = vcmp.eq.f32.partialorder %v442, 0.0
      %v463 = vand.u32 %v442, 2147483648
      %v464 = vsel %vm462, %v463, %v461
      %v465 = vrsqrt.pop %v443
      %v466 = vmul.f32 %v443, %v465
      %vm467 = vcmp.eq.f32.partialorder %v443, inf
      %v468 = vsel %vm467, %v443, %v466
      %vm469 = vcmp.eq.f32.partialorder %v443, 0.0
      %v470 = vand.u32 %v443, 2147483648
      %v471 = vsel %vm469, %v470, %v468
      %v472 = vmul.f32 %v450, 2.0
      %v473 = vmul.f32 %v457, 2.0
      %v474 = vmul.f32 %v464, 2.0
      %v475 = vmul.f32 %v471, 2.0
      %v476 = vsub.f32 %v436, %v472
      %v477 = vsub.f32 %v437, %v473
      %v478 = vsub.f32 %v438, %v474
      %v479 = vsub.f32 %v439, %v475
      %v480 = vmax.f32 %v476, 0.0
      %v481 = vmax.f32 %v477, 0.0
      %v482 = vmax.f32 %v478, 0.0
      %v483 = vmax.f32 %v479, 0.0
      %v484 = vadd.f32 %v480, %v481
      %v485 = vadd.f32 %v484, %v482
      %v486 = vadd.f32 %v485, %v483
      %487 = vadd.xlane.f32.xlu0 %v486
      %v488 = vpop.xlane.xlu0 %487
      %v489 = vrot.slane %v488, 4
      %v490 = vadd.f32 %v488, %v489
      %v491 = vrot.slane %v490, 2
      %v492 = vadd.f32 %v490, %v491
      %v493 = vrot.slane %v492, 1
      %v494 = vadd.f32 %v492, %v493
      %s495 = vtos %v494
      %v496 = vlog2.pop %v432
      %v497 = vmul.f32 %v496, 0.6931472
      %v498 = vlog2.pop %v433
      %v499 = vmul.f32 %v498, 0.6931472
      %v500 = vlog2.pop %v434
      %v501 = vmul.f32 %v500, 0.6931472
      %v502 = vlog2.pop %v435
      %v503 = vmul.f32 %v502, 0.6931472
      %v504 = vlog2.pop %v416
      %v505 = vmul.f32 %v504, 0.6931472
      %v506 = vlog2.pop %v417
      %v507 = vmul.f32 %v506, 0.6931472
      %v508 = vlog2.pop %v418
      %v509 = vmul.f32 %v508, 0.6931472
      %v510 = vlog2.pop %v419
      %v511 = vmul.f32 %v510, 0.6931472
      %v512 = vsub.f32 %v497, %v505
      %v513 = vsub.f32 %v499, %v507
      %v514 = vsub.f32 %v501, %v509
      %v515 = vsub.f32 %v503, %v511
      %v516 = vand.u32 2147483647, %v512
      %v517 = vand.u32 2147483647, %v513
      %v518 = vand.u32 2147483647, %v514
      %v519 = vand.u32 2147483647, %v515
      %v520 = vadd.f32 %v516, %v517
      %v521 = vadd.f32 %v520, %v518
      %v522 = vadd.f32 %v521, %v519
      %523 = vadd.xlane.f32.xlu0 %v522
      %v524 = vpop.xlane.xlu0 %523
      %v525 = vrot.slane %v524, 4
      %v526 = vadd.f32 %v524, %v525
      %v527 = vrot.slane %v526, 2
      %v528 = vadd.f32 %v526, %v527
      %v529 = vrot.slane %v528, 1
      %v530 = vadd.f32 %v528, %v529
      %s531 = vtos %v530
      %s532 = smul.f32 %s531, 0.5
      %s533 = smul.u32 %s19, 128
      %v534 = vlaneseq
      %v535 = vand.u32 %v534, 127
      %v536 = vstv %s533
      %v537 = vadd.s32 %v536, %v535
      %vm538 = vcmp.lt.s32.totalorder %v537, 17
      %v539 = vlaneseq
      %v540 = vshrl.u32 %v539, 7
      %v541 = vadd.s32 %v540, 8
      %v542 = vadd.s32 %v540, 16
      %v543 = vadd.s32 %v540, 24
      %vm544 = vcmp.lt.s32.totalorder %v540, 26
      %vm545 = vcmp.lt.s32.totalorder %v541, 26
      %vm546 = vcmp.lt.s32.totalorder %v542, 26
      %vm547 = vcmp.lt.s32.totalorder %v543, 26
      %v548 = vsel %vm544, 1, 0
      %v549 = vsel %vm545, 1, 0
      %v550 = vsel %vm546, 1, 0
      %v551 = vsel %vm547, 1, 0
      %vm552 = vcmp.eq.s32.totalorder %v548, 1
      %vm553 = vcmp.eq.s32.totalorder %v549, 1
      %vm554 = vcmp.eq.s32.totalorder %v550, 1
      %vm555 = vcmp.eq.s32.totalorder %v551, 1
      %v556 = vsel %vm538, 1, 0
      %vm557 = vcmp.eq.s32.totalorder %v556, 1
      %vm558 = vmand %vm552, %vm557
      %vm559 = vmand %vm553, %vm557
      %vm560 = vmand %vm554, %vm557
      %vm561 = vmand %vm555, %vm557
      %v562 = vsel %vm558, %v432, 0.0
      %v563 = vsel %vm559, %v433, 0.0
      %v564 = vsel %vm560, %v434, 0.0
      %v565 = vsel %vm561, %v435, 0.0
      %v566 = vadd.f32 %v562, %v563
      %v567 = vadd.f32 %v566, %v564
      %v568 = vadd.f32 %v567, %v565
      %569 = vadd.xlane.f32.xlu0 %v568
      %v570 = vpop.xlane.xlu0 %569
      %v571 = vrot.slane %v570, 4
      %v572 = vadd.f32 %v570, %v571
      %v573 = vrot.slane %v572, 2
      %v574 = vadd.f32 %v572, %v573
      %v575 = vrot.slane %v574, 1
      %v576 = vadd.f32 %v574, %v575
      %s577 = vtos %v576
      %v578 = vld [vmem:[%s226] sm:$0xff]
      %vm579 = vcmp.eq.s32.totalorder %v535, 0
      %vm580 = vcmp.eq.s32.totalorder %v535, 1
      %vm581 = vcmp.eq.s32.totalorder %v535, 2
      %v582 = vstv %s532
      %v583 = vsel %vm581, %v582, 0.0
      %v584 = vstv %s577
      %v585 = vsel %vm580, %v584, %v583
      %v586 = vstv %s495
      %v587 = vsel %vm579, %v586, %v585
      %v588 = vadd.f32 %v578, %v587
      %589 = vst [vmem:[%s226] sm:$0xff] %v588
      %p590 = scmp.lt.s32.totalorder %s18, 1
      %s591 = scalar_select %p590, %s18, 1
      %s592 = smul.addr %s591, 8
      %s593 = scalar_lea.vmem %s3, %s592
      // Predicated region
      $region37: #{loss.4} parent=31 // pred_check
        %p594 = pneg %p122
      $region38: #{loss.4} parent=31 // pred_check_branch
        %596 = sbr.rel (%p594) target = $region40
      $region39: #{loss.4} parent=31 // pred_region
        _
      $region40: #{loss.4} parent=31 // pred_fallthru
        _
    $region32: #{loss.4} parent=5 // pred_fallthru
      _
    %p597 = scmp.le.s32.totalorder 2, %s9
    // Predicated region
    $region41: #{loss.4} parent=5 // pred_check
      %p598 = pneg %p597
    $region42: #{loss.4} parent=5 // pred_check_branch
      %600 = sbr.rel (%p598) target = $region44
    $region43: #{loss.4} parent=5 // pred_region
      %s601 = ssub.s32 %s9, 2
      // Predicated region
      $region45: #{loss.4} parent=43 // pred_check
        %p602 = pneg %p128
      $region46: #{loss.4} parent=43 // pred_check_branch
        %604 = sbr.rel (%p602) target = $region48
      $region47: #{loss.4} parent=43 // pred_region
        %p605 = scmp.lt.s32.totalorder %s20, 1
        %s606 = scalar_select %p605, %s20, 1
        %s607 = smul.addr %s606, 8
        %s608 = scalar_lea.vmem %s3, %s607
      $region48: #{loss.4} parent=43 // pred_fallthru
        _
    $region44: #{loss.4} parent=5 // pred_fallthru
      _
  $region6: #{loss.4} parent=0 // loop_footer
    %s13 = sadd.s32 1, %s9
  $region7: #{loss.4} parent=0 // loop_footer_branch
    %8 = sbr.rel target = $region3
  $region8: #{loss.4} parent=0 // loop_exit
    _

// kernel: loss.5
$region0: #{loss.5}
  #allocation0 [shape = 'u32[]', space=smem, size = 0x4, offset = 0x4, fixed_abs, tag = 'smem constant byte address 0x4 - core index']
  #allocation1 [shape = 'u32[144,128]{1,0:T(1,128)}', space=vmem, size = 0x12000, scoped, tag = 'internal scratch']
  %s0 = inlined_call_operand.vmem [shape: bf16[64,32], index: 0, kind: input, shape index: {}]
  %s1 = inlined_call_operand.vmem [shape: bf16[64,32], index: 1, kind: input, shape index: {}]
  %s2 = inlined_call_operand.vmem [shape: bf16[32,256], index: 2, kind: input, shape index: {}]
  %s3 = inlined_call_operand.vmem [shape: f32[2,8,128], index: 3, kind: output, shape index: {}]
  %s4 = sld [smem:[#allocation0]]
  $region49: #{loss.5} parent=0
    _
  %s6 = ssub.s32 1, %s4
  %s7 = scalar_select 0, %s6, %s4
  loop: start=0, step=1, limit=4
  $region2: #{loss.5} parent=0 // loop_pre_header
    _
  $region3: #{loss.5} parent=0 // loop_header
    %s9 = sphi 0, %s13
    %p10 = scmp.ge.s32.totalorder %s9, 4
    %s16 = sphi 0, %s28
    %s17 = sphi 0, %s24
    %s18 = sphi 0, %s16
    %s19 = sphi 0, %s17
    %s20 = sphi 0, %s18
    %s21 = sphi 0, %s19
    %s31 = sphi 0, %s33
    %s34 = sphi 0, %s31
    %s35 = sphi 0, %s34
    %s51 = sphi 0, %s35
    %s57 = sphi 0, %s59
    %s60 = sphi 0, %s57
    %s61 = sphi 0, %s60
    %s77 = sphi 0, %s61
    %s83 = sphi 0, %s85
    %s86 = sphi 0, %s83
    %s87 = sphi 0, %s86
    %s103 = sphi 0, %s87
    %s109 = sphi 0, %s111
    %s112 = sphi 0, %s109
    %s113 = sphi 0, %s112
    %s129 = sphi 0, %s113
  $region4: #{loss.5} parent=0 // loop_header_branch
    %12 = sbr.rel (%p10) target = $region8
  $region5: #{loss.5} parent=0 // loop_body
    %s14 = ssub.s32 %s9, 1
    %s15 = ssub.s32 %s9, 2
    %s22 = sadd.s32 1, %s17
    %p23 = scmp.ge.s32.totalorder %s22, 1
    %s24 = scalar_select %p23, 0, %s22
    %s25 = sadd.s32 1, %s16
    %s26 = scalar_select %p23, %s25, %s16
    %p27 = scmp.ge.s32.totalorder %s26, 2
    %s28 = scalar_select %p27, 0, %s26
    %s29 = ssub.s32 %s16, %s28
    %p30 = scmp.eq.s32.totalorder %s29, 0
    %s32 = sadd.s32 %s31, 1
    %s33 = scalar_select %p30, %s31, %s32
    %p36 = pneg %p30
    %p37 = scmp.eq.s32.totalorder %s9, 1
    %p38 = por %p36, %p37
    %p39 = scmp.ne.s32.totalorder %s31, %s34
    %p40 = scmp.eq.s32.totalorder %s9, 0
    %p41 = por %p39, %p40
    %p42 = scmp.ne.s32.totalorder %s31, %s34
    %p43 = scmp.eq.s32.totalorder %s14, 1
    %p44 = por %p42, %p43
    %p45 = scmp.ne.s32.totalorder %s34, %s35
    %p46 = scmp.eq.s32.totalorder %s14, 0
    %p47 = por %p45, %p46
    %p48 = scmp.ne.s32.totalorder %s34, %s35
    %p49 = scmp.eq.s32.totalorder %s15, 1
    %p50 = por %p48, %p49
    %p52 = scmp.ne.s32.totalorder %s35, %s51
    %p53 = scmp.eq.s32.totalorder %s15, 0
    %p54 = por %p52, %p53
    %s55 = ssub.s32 %s16, %s28
    %p56 = scmp.eq.s32.totalorder %s55, 0
    %s58 = sadd.s32 %s57, 1
    %s59 = scalar_select %p56, %s57, %s58
    %p62 = pneg %p56
    %p63 = scmp.eq.s32.totalorder %s9, 1
    %p64 = por %p62, %p63
    %p65 = scmp.ne.s32.totalorder %s57, %s60
    %p66 = scmp.eq.s32.totalorder %s9, 0
    %p67 = por %p65, %p66
    %p68 = scmp.ne.s32.totalorder %s57, %s60
    %p69 = scmp.eq.s32.totalorder %s14, 1
    %p70 = por %p68, %p69
    %p71 = scmp.ne.s32.totalorder %s60, %s61
    %p72 = scmp.eq.s32.totalorder %s14, 0
    %p73 = por %p71, %p72
    %p74 = scmp.ne.s32.totalorder %s60, %s61
    %p75 = scmp.eq.s32.totalorder %s15, 1
    %p76 = por %p74, %p75
    %p78 = scmp.ne.s32.totalorder %s61, %s77
    %p79 = scmp.eq.s32.totalorder %s15, 0
    %p80 = por %p78, %p79
    %s81 = ssub.s32 %s17, %s24
    %p82 = scmp.eq.s32.totalorder %s81, 0
    %s84 = sadd.s32 %s83, 1
    %s85 = scalar_select %p82, %s83, %s84
    %p88 = pneg %p82
    %p89 = scmp.eq.s32.totalorder %s9, 1
    %p90 = por %p88, %p89
    %p91 = scmp.ne.s32.totalorder %s83, %s86
    %p92 = scmp.eq.s32.totalorder %s9, 0
    %p93 = por %p91, %p92
    %p94 = scmp.ne.s32.totalorder %s83, %s86
    %p95 = scmp.eq.s32.totalorder %s14, 1
    %p96 = por %p94, %p95
    %p97 = scmp.ne.s32.totalorder %s86, %s87
    %p98 = scmp.eq.s32.totalorder %s14, 0
    %p99 = por %p97, %p98
    %p100 = scmp.ne.s32.totalorder %s86, %s87
    %p101 = scmp.eq.s32.totalorder %s15, 1
    %p102 = por %p100, %p101
    %p104 = scmp.ne.s32.totalorder %s87, %s103
    %p105 = scmp.eq.s32.totalorder %s15, 0
    %p106 = por %p104, %p105
    %s107 = ssub.s32 %s16, %s28
    %p108 = scmp.eq.s32.totalorder %s107, 0
    %s110 = sadd.s32 %s109, 1
    %s111 = scalar_select %p108, %s109, %s110
    %p114 = pneg %p108
    %p115 = scmp.eq.s32.totalorder %s9, 1
    %p116 = por %p114, %p115
    %p117 = scmp.ne.s32.totalorder %s109, %s112
    %p118 = scmp.eq.s32.totalorder %s9, 0
    %p119 = por %p117, %p118
    %p120 = scmp.ne.s32.totalorder %s109, %s112
    %p121 = scmp.eq.s32.totalorder %s14, 1
    %p122 = por %p120, %p121
    %p123 = scmp.ne.s32.totalorder %s112, %s113
    %p124 = scmp.eq.s32.totalorder %s14, 0
    %p125 = por %p123, %p124
    %p126 = scmp.ne.s32.totalorder %s112, %s113
    %p127 = scmp.eq.s32.totalorder %s15, 1
    %p128 = por %p126, %p127
    %p130 = scmp.ne.s32.totalorder %s113, %s129
    %p131 = scmp.eq.s32.totalorder %s15, 0
    %p132 = por %p130, %p131
    %p133 = scmp.le.s32.totalorder 1, %s9
    %p134 = scmp.lt.s32.totalorder %s9, 3
    %p135 = pnand %p133, %p134
    %p136 = pneg %p135
    // Predicated region
    $region9: #{loss.5} parent=5 // pred_check
      _
    $region10: #{loss.5} parent=5 // pred_check_branch
      %138 = sbr.rel (%p135) target = $region12
    $region11: #{loss.5} parent=5 // pred_region
      %s139 = ssub.s32 %s9, 1
      // Predicated region
      $region13: #{loss.5} parent=11 // pred_check
        %p140 = pneg %p99
      $region14: #{loss.5} parent=11 // pred_check_branch
        %142 = sbr.rel (%p140) target = $region16
      $region15: #{loss.5} parent=11 // pred_region
        %s143 = smul.u32 2, %s19
        %p144 = scmp.lt.s32.totalorder %s143, 1
        %s145 = scalar_select %p144, %s143, 1
        %s146 = smul.addr %s145, 4
        %s147 = scalar_lea.vmem %s2, %s146
        %s148 = smul.u32 2, %s19
      $region16: #{loss.5} parent=11 // pred_fallthru
        _
    $region12: #{loss.5} parent=5 // pred_fallthru
      _
    %p149 = scmp.lt.s32.totalorder %s9, 2
    // Predicated region
    $region17: #{loss.5} parent=5 // pred_check
      %p150 = pneg %p149
    $region18: #{loss.5} parent=5 // pred_check_branch
      %152 = sbr.rel (%p150) target = $region20
    $region19: #{loss.5} parent=5 // pred_region
      // Predicated region
      $region21: #{loss.5} parent=19 // pred_check
        %p153 = pneg %p41
      $region22: #{loss.5} parent=19 // pred_check_branch
        %155 = sbr.rel (%p153) target = $region24
      $region23: #{loss.5} parent=19 // pred_region
        %s156 = smul.u32 4, %s16
        %p157 = scmp.lt.s32.totalorder %s156, 7
        %s158 = scalar_select %p157, %s156, 7
        %s159 = smul.addr %s158, 4
        %s160 = scalar_lea.vmem %s0, %s159
        %s161 = smul.u32 4, %s16
      $region24: #{loss.5} parent=19 // pred_fallthru
        _
      // Predicated region
      $region25: #{loss.5} parent=19 // pred_check
        %p162 = pneg %p67
      $region26: #{loss.5} parent=19 // pred_check_branch
        %164 = sbr.rel (%p162) target = $region28
      $region27: #{loss.5} parent=19 // pred_region
        %s165 = smul.u32 4, %s16
        %p166 = scmp.lt.s32.totalorder %s165, 7
        %s167 = scalar_select %p166, %s165, 7
        %s168 = smul.addr %s167, 4
        %s169 = scalar_lea.vmem %s1, %s168
        %s170 = smul.u32 4, %s16
      $region28: #{loss.5} parent=19 // pred_fallthru
        _
    $region20: #{loss.5} parent=5 // pred_fallthru
      _
    %p171 = scmp.le.s32.totalorder 1, %s9
    %p172 = scmp.lt.s32.totalorder %s9, 3
    %p173 = pnand %p171, %p172
    %p174 = pneg %p173
    // Predicated region
    $region29: #{loss.5} parent=5 // pred_check
      _
    $region30: #{loss.5} parent=5 // pred_check_branch
      %176 = sbr.rel (%p173) target = $region32
    $region31: #{loss.5} parent=5 // pred_region
      %s177 = ssub.s32 %s9, 1
      %s178 = smul.u32 4, %s18
      %p179 = scmp.lt.s32.totalorder %s178, 7
      %s180 = scalar_select %p179, %s178, 7
      %s181 = smul.addr %s180, 4
      %s182 = scalar_lea.vmem %s0, %s181
      %p183 = pneg %p47
      %p184 = pneg %p44
      %s185 = smul.u32 4, %s18
      %p186 = scmp.lt.s32.totalorder %s185, 7
      %s187 = scalar_select %p186, %s185, 7
      %s188 = smul.addr %s187, 4
      %s189 = scalar_lea.vmem %s1, %s188
      %p190 = pneg %p73
      %p191 = pneg %p70
      %s192 = smul.u32 2, %s19
      %p193 = scmp.lt.s32.totalorder %s192, 1
      %s194 = scalar_select %p193, %s192, 1
      %s195 = smul.addr %s194, 4
      %s196 = scalar_lea.vmem %s2, %s195
      %p197 = pneg %p99
      %p198 = pneg %p96
      %p199 = pneg %p125
      %p200 = pneg %p122
      %p201 = scmp.lt.s32.totalorder %s18, 1
      %s202 = scalar_select %p201, %s18, 1
      %s203 = smul.addr %s202, 8
      %s204 = scalar_lea.vmem %s3, %s203
      %s205 = smul.u32 4, %s18
      %p206 = scmp.lt.s32.totalorder %s205, 7
      %s207 = scalar_select %p206, %s205, 7
      %s208 = smul.addr %s207, 4
      %s209 = scalar_lea.vmem %s0, %s208
      %s210 = smul.u32 4, %s18
      %s211 = smul.u32 4, %s18
      %p212 = scmp.lt.s32.totalorder %s211, 7
      %s213 = scalar_select %p212, %s211, 7
      %s214 = smul.addr %s213, 4
      %s215 = scalar_lea.vmem %s1, %s214
      %s216 = smul.u32 4, %s18
      %s217 = smul.u32 2, %s19
      %p218 = scmp.lt.s32.totalorder %s217, 1
      %s219 = scalar_select %p218, %s217, 1
      %s220 = smul.addr %s219, 4
      %s221 = scalar_lea.vmem %s2, %s220
      %s222 = smul.u32 2, %s19
      %p223 = scmp.lt.s32.totalorder %s18, 1
      %s224 = scalar_select %p223, %s18, 1
      %s225 = smul.addr %s224, 8
      %s226 = scalar_lea.vmem %s3, %s225
      %p228 = scmp.eq.s32.totalorder %s19, 0
      // Predicated region
      $region33: #{loss.5} parent=31 // pred_check
        %p229 = pneg %p228
      $region34: #{loss.5} parent=31 // pred_check_branch
        %231 = sbr.rel (%p229) target = $region36
      $region35: #{loss.5} parent=31 // pred_region
        %232 = vst [vmem:[%s226] sm:$0xff] 0.0
      $region36: #{loss.5} parent=31 // pred_fallthru
        _
      %v233 = vld [vmem:[%s221] sm:$0xff]
      %v234 = vld [vmem:[%s221 + $0x8] sm:$0xff]
      %v235 = vld [vmem:[%s221 + $0x10] sm:$0xff]
      %v236 = vld [vmem:[%s221 + $0x18] sm:$0xff]
      %v237 = vld [vmem:[%s209] sm:$0xf]
      %v238 = vld [vmem:[%s209 + $0x4] sm:$0xf]
      %v239 = vld [vmem:[%s209 + $0x8] sm:$0xf]
      %v240 = vld [vmem:[%s209 + $0xc] sm:$0xf]
      %v245 = vunpack.c.l.b16 %v237
      %v246 = vunpack.c.l.b16 %v238
      %v247 = vunpack.c.l.b16 %v239
      %v248 = vunpack.c.l.b16 %v240
      %v249 = vpack.c.b16 %v246, %v245
      %v250 = vpack.c.b16 %v248, %v247
      %v255 = vunpack.c.l.b16 %v233
      %v256 = vunpack.c.h.b16 %v233
      %v257 = vunpack.c.l.b16 %v234
      %v258 = vunpack.c.h.b16 %v234
      %v259 = vunpack.c.l.b16 %v235
      %v260 = vunpack.c.h.b16 %v235
      %v261 = vunpack.c.l.b16 %v236
      %v262 = vunpack.c.h.b16 %v236
      %v263 = vpack.c.b16 %v257, %v255
      %v264 = vpack.c.b16 %v258, %v256
      %v265 = vpack.c.b16 %v261, %v259
      %v266 = vpack.c.b16 %v262, %v260
      %vm271 = vcmask 261120
      %v273 = vsel %vm271, %v249, 0
      %v276 = vsel %vm271, %v250, 0
      %278 = vmatprep.subr.bf16.mxu0 %v264
      %279 = vmatpush1.bf16.msra.mxu0 %v263
      %280 = vmatprep.subr.bf16.mxu0 %v266
      %281 = vmatpush1.bf16.msra.mxu0 %v265
      %282 = vmatprep.subr.bf16.mxu0 0
      %283 = vmatpush1.bf16.msra.mxu0 0
      %284 = vmatprep.subr.bf16.mxu0 0
      %285 = vmatpush1.bf16.msra.mxu0 0
      %286 = vmatprep.subr.bf16.mxu0 0
      %287 = vmatpush1.bf16.msra.mxu0 0
      %288 = vmatprep.subr.bf16.mxu0 0
      %289 = vmatpush1.bf16.msra.mxu0 0
      %290 = vmatprep.subr.bf16.mxu0 0
      %291 = vmatpush1.bf16.msra.mxu0 0
      %292 = vmatprep.subr.bf16.mxu0 0
      %293 = vmatpush1.bf16.msra.mxu0 0
      %294 = vmatprep.subr.bf16.mxu0 0
      %295 = vmatpush1.bf16.msra.mxu0 0
      %296 = vmatprep.subr.bf16.mxu0 0
      %297 = vmatpush1.bf16.msra.mxu0 0
      %298 = vmatprep.subr.bf16.mxu0 0
      %299 = vmatpush1.bf16.msra.mxu0 0
      %300 = vmatprep.subr.bf16.mxu0 0
      %301 = vmatpush1.bf16.msra.mxu0 0
      %302 = vmatprep.subr.bf16.mxu0 0
      %303 = vmatpush1.bf16.msra.mxu0 0
      %304 = vmatprep.subr.bf16.mxu0 0
      %305 = vmatpush1.bf16.msra.mxu0 0
      %306 = vmatprep.subr.bf16.mxu0 0
      %307 = vmatpush1.bf16.msra.mxu0 0
      %308 = vmatprep.subr.bf16.mxu0 0
      %309 = vmatpush1.bf16.msra.mxu0 0
      %310 = vmatprep.mubr.bf16.mxu0 0
      %311 = vmatmul.mubr.bf16.gmra.mrb[0].mxu0 %v273
      %v312 = vpop.f32.mrb[0].mxu0
      %v313 = vadd.f32 0.0, %v312
      %v314 = vpop.f32.mrb[0].mxu0
      %v315 = vadd.f32 0.0, %v314
      %v316 = vpop.f32.mrb[0].mxu0
      %v317 = vadd.f32 0.0, %v316
      %v318 = vpop.f32.mrb[0].mxu0
      %v319 = vadd.f32 0.0, %v318
      %320 = vmatprep.mubr.bf16.mxu0 0
      %321 = vmatmul.mubr.bf16.gmra.mrb[0].mxu0 %v276
      %v322 = vpop.f32.mrb[0].mxu0
      %v323 = vadd.f32 0.0, %v322
      %v324 = vpop.f32.mrb[0].mxu0
      %v325 = vadd.f32 0.0, %v324
      %v326 = vpop.f32.mrb[0].mxu0
      %v327 = vadd.f32 0.0, %v326
      %v328 = vpop.f32.mrb[0].mxu0
      %v329 = vadd.f32 0.0, %v328
      %330 = vdwg.mxu0
      %v331 = vld [vmem:[%s215] sm:$0xf]
      %v332 = vld [vmem:[%s215 + $0x4] sm:$0xf]
      %v333 = vld [vmem:[%s215 + $0x8] sm:$0xf]
      %v334 = vld [vmem:[%s215 + $0xc] sm:$0xf]
      %v339 = vunpack.c.l.b16 %v331
      %v340 = vunpack.c.l.b16 %v332
      %v341 = vunpack.c.l.b16 %v333
      %v342 = vunpack.c.l.b16 %v334
      %v343 = vpack.c.b16 %v340, %v339
      %v344 = vpack.c.b16 %v342, %v341
      %v346 = vsel %vm271, %v343, 0
      %v349 = vsel %vm271, %v344, 0
      %351 = vmatprep.subr.bf16.mxu0 %v264
      %352 = vmatpush1.bf16.msra.mxu0 %v263
      %353 = vmatprep.subr.bf16.mxu0 %v266
      %354 = vmatpush1.bf16.msra.mxu0 %v265
      %355 = vmatprep.subr.bf16.mxu0 0
      %356 = vmatpush1.bf16.msra.mxu0 0
      %357 = vmatprep.subr.bf16.mxu0 0
      %358 = vmatpush1.bf16.msra.mxu0 0
      %359 = vmatprep.subr.bf16.mxu0 0
      %360 = vmatpush1.bf16.msra.mxu0 0
      %361 = vmatprep.subr.bf16.mxu0 0
      %362 = vmatpush1.bf16.msra.mxu0 0
      %363 = vmatprep.subr.bf16.mxu0 0
      %364 = vmatpush1.bf16.msra.mxu0 0
      %365 = vmatprep.subr.bf16.mxu0 0
      %366 = vmatpush1.bf16.msra.mxu0 0
      %367 = vmatprep.subr.bf16.mxu0 0
      %368 = vmatpush1.bf16.msra.mxu0 0
      %369 = vmatprep.subr.bf16.mxu0 0
      %370 = vmatpush1.bf16.msra.mxu0 0
      %371 = vmatprep.subr.bf16.mxu0 0
      %372 = vmatpush1.bf16.msra.mxu0 0
      %373 = vmatprep.subr.bf16.mxu0 0
      %374 = vmatpush1.bf16.msra.mxu0 0
      %375 = vmatprep.subr.bf16.mxu0 0
      %376 = vmatpush1.bf16.msra.mxu0 0
      %377 = vmatprep.subr.bf16.mxu0 0
      %378 = vmatpush1.bf16.msra.mxu0 0
      %379 = vmatprep.subr.bf16.mxu0 0
      %380 = vmatpush1.bf16.msra.mxu0 0
      %381 = vmatprep.subr.bf16.mxu0 0
      %382 = vmatpush1.bf16.msra.mxu0 0
      %383 = vmatprep.mubr.bf16.mxu0 0
      %384 = vmatmul.mubr.bf16.gmra.mrb[0].mxu0 %v346
      %v385 = vpop.f32.mrb[0].mxu0
      %v386 = vadd.f32 0.0, %v385
      %v387 = vpop.f32.mrb[0].mxu0
      %v388 = vadd.f32 0.0, %v387
      %v389 = vpop.f32.mrb[0].mxu0
      %v390 = vadd.f32 0.0, %v389
      %v391 = vpop.f32.mrb[0].mxu0
      %v392 = vadd.f32 0.0, %v391
      %393 = vmatprep.mubr.bf16.mxu0 0
      %394 = vmatmul.mubr.bf16.gmra.mrb[0].mxu0 %v349
      %v395 = vpop.f32.mrb[0].mxu0
      %v396 = vadd.f32 0.0, %v395
      %v397 = vpop.f32.mrb[0].mxu0
      %v398 = vadd.f32 0.0, %v397
      %v399 = vpop.f32.mrb[0].mxu0
      %v400 = vadd.f32 0.0, %v399
      %v401 = vpop.f32.mrb[0].mxu0
      %v402 = vadd.f32 0.0, %v401
      %403 = vdwg.mxu0
      %v404 = vmul.f32 %v313, %v313
      %v405 = vmul.f32 %v317, %v317
      %v406 = vmul.f32 %v323, %v323
      %v407 = vmul.f32 %v327, %v327
      %v408 = vmul.f32 %v315, %v315
      %v409 = vmul.f32 %v319, %v319
      %v410 = vmul.f32 %v325, %v325
      %v411 = vmul.f32 %v329, %v329
      %v412 = vadd.f32 %v404, %v408
      %v413 = vadd.f32 %v405, %v409
      %v414 = vadd.f32 %v406, %v410
      %v415 = vadd.f32 %v407, %v411
      %v416 = vmax.f32 %v412, 1e-07
      %v417 = vmax.f32 %v413, 1e-07
      %v418 = vmax.f32 %v414, 1e-07
      %v419 = vmax.f32 %v415, 1e-07
      %v420 = vmul.f32 %v386, %v386
      %v421 = vmul.f32 %v390, %v390
      %v422 = vmul.f32 %v396, %v396
      %v423 = vmul.f32 %v400, %v400
      %v424 = vmul.f32 %v388, %v388
      %v425 = vmul.f32 %v392, %v392
      %v426 = vmul.f32 %v398, %v398
      %v427 = vmul.f32 %v402, %v402
      %v428 = vadd.f32 %v420, %v424
      %v429 = vadd.f32 %v421, %v425
      %v430 = vadd.f32 %v422, %v426
      %v431 = vadd.f32 %v423, %v427
      %v432 = vmax.f32 %v428, 1e-07
      %v433 = vmax.f32 %v429, 1e-07
      %v434 = vmax.f32 %v430, 1e-07
      %v435 = vmax.f32 %v431, 1e-07
      %v436 = vadd.f32 %v416, %v432
      %v437 = vadd.f32 %v417, %v433
      %v438 = vadd.f32 %v418, %v434
      %v439 = vadd.f32 %v419, %v435
      %v440 = vmul.f32 %v416, %v432
      %v441 = vmul.f32 %v417, %v433
      %v442 = vmul.f32 %v418, %v434
      %v443 = vmul.f32 %v419, %v435
      %v444 = vrsqrt.pop %v440
      %v445 = vmul.f32 %v440, %v444
      %vm446 = vcmp.eq.f32.partialorder %v440, inf
      %v447 = vsel %vm446, %v440, %v445
      %vm448 = vcmp.eq.f32.partialorder %v440, 0.0
      %v449 = vand.u32 %v440, 2147483648
      %v450 = vsel %vm448, %v449, %v447
      %v451 = vrsqrt.pop %v441
      %v452 = vmul.f32 %v441, %v451
      %vm453 = vcmp.eq.f32.partialorder %v441, inf
      %v454 = vsel %vm453, %v441, %v452
      %vm455 = vcmp.eq.f32.partialorder %v441, 0.0
      %v456 = vand.u32 %v441, 2147483648
      %v457 = vsel %vm455, %v456, %v454
      %v458 = vrsqrt.pop %v442
      %v459 = vmul.f32 %v442, %v458
      %vm460 = vcmp.eq.f32.partialorder %v442, inf
      %v461 = vsel %vm460, %v442, %v459
      %vm462 = vcmp.eq.f32.partialorder %v442, 0.0
      %v463 = vand.u32 %v442, 2147483648
      %v464 = vsel %vm462, %v463, %v461
      %v465 = vrsqrt.pop %v443
      %v466 = vmul.f32 %v443, %v465
      %vm467 = vcmp.eq.f32.partialorder %v443, inf
      %v468 = vsel %vm467, %v443, %v466
      %vm469 = vcmp.eq.f32.partialorder %v443, 0.0
      %v470 = vand.u32 %v443, 2147483648
      %v471 = vsel %vm469, %v470, %v468
      %v472 = vmul.f32 %v450, 2.0
      %v473 = vmul.f32 %v457, 2.0
      %v474 = vmul.f32 %v464, 2.0
      %v475 = vmul.f32 %v471, 2.0
      %v476 = vsub.f32 %v436, %v472
      %v477 = vsub.f32 %v437, %v473
      %v478 = vsub.f32 %v438, %v474
      %v479 = vsub.f32 %v439, %v475
      %v480 = vmax.f32 %v476, 0.0
      %v481 = vmax.f32 %v477, 0.0
      %v482 = vmax.f32 %v478, 0.0
      %v483 = vmax.f32 %v479, 0.0
      %v484 = vadd.f32 %v480, %v481
      %v485 = vadd.f32 %v484, %v482
      %v486 = vadd.f32 %v485, %v483
      %487 = vadd.xlane.f32.xlu0 %v486
      %v488 = vpop.xlane.xlu0 %487
      %v489 = vrot.slane %v488, 4
      %v490 = vadd.f32 %v488, %v489
      %v491 = vrot.slane %v490, 2
      %v492 = vadd.f32 %v490, %v491
      %v493 = vrot.slane %v492, 1
      %v494 = vadd.f32 %v492, %v493
      %s495 = vtos %v494
      %v496 = vlog2.pop %v432
      %v497 = vmul.f32 %v496, 0.6931472
      %v498 = vlog2.pop %v433
      %v499 = vmul.f32 %v498, 0.6931472
      %v500 = vlog2.pop %v434
      %v501 = vmul.f32 %v500, 0.6931472
      %v502 = vlog2.pop %v435
      %v503 = vmul.f32 %v502, 0.6931472
      %v504 = vlog2.pop %v416
      %v505 = vmul.f32 %v504, 0.6931472
      %v506 = vlog2.pop %v417
      %v507 = vmul.f32 %v506, 0.6931472
      %v508 = vlog2.pop %v418
      %v509 = vmul.f32 %v508, 0.6931472
      %v510 = vlog2.pop %v419
      %v511 = vmul.f32 %v510, 0.6931472
      %v512 = vsub.f32 %v497, %v505
      %v513 = vsub.f32 %v499, %v507
      %v514 = vsub.f32 %v501, %v509
      %v515 = vsub.f32 %v503, %v511
      %v516 = vand.u32 2147483647, %v512
      %v517 = vand.u32 2147483647, %v513
      %v518 = vand.u32 2147483647, %v514
      %v519 = vand.u32 2147483647, %v515
      %v520 = vadd.f32 %v516, %v517
      %v521 = vadd.f32 %v520, %v518
      %v522 = vadd.f32 %v521, %v519
      %523 = vadd.xlane.f32.xlu0 %v522
      %v524 = vpop.xlane.xlu0 %523
      %v525 = vrot.slane %v524, 4
      %v526 = vadd.f32 %v524, %v525
      %v527 = vrot.slane %v526, 2
      %v528 = vadd.f32 %v526, %v527
      %v529 = vrot.slane %v528, 1
      %v530 = vadd.f32 %v528, %v529
      %s531 = vtos %v530
      %s532 = smul.f32 %s531, 0.5
      %s533 = smul.u32 %s19, 128
      %v534 = vlaneseq
      %v535 = vand.u32 %v534, 127
      %v536 = vstv %s533
      %v537 = vadd.s32 %v536, %v535
      %vm538 = vcmp.lt.s32.totalorder %v537, 17
      %v539 = vsel %vm538, 1, 0
      %vm540 = vcmp.eq.s32.totalorder %v539, 1
      %v541 = vsel %vm540, %v432, 0.0
      %v542 = vsel %vm540, %v433, 0.0
      %v543 = vsel %vm540, %v434, 0.0
      %v544 = vsel %vm540, %v435, 0.0
      %v545 = vadd.f32 %v541, %v542
      %v546 = vadd.f32 %v545, %v543
      %v547 = vadd.f32 %v546, %v544
      %548 = vadd.xlane.f32.xlu0 %v547
      %v549 = vpop.xlane.xlu0 %548
      %v550 = vrot.slane %v549, 4
      %v551 = vadd.f32 %v549, %v550
      %v552 = vrot.slane %v551, 2
      %v553 = vadd.f32 %v551, %v552
      %v554 = vrot.slane %v553, 1
      %v555 = vadd.f32 %v553, %v554
      %s556 = vtos %v555
      %v557 = vld [vmem:[%s226] sm:$0xff]
      %vm558 = vcmp.eq.s32.totalorder %v535, 0
      %vm559 = vcmp.eq.s32.totalorder %v535, 1
      %vm560 = vcmp.eq.s32.totalorder %v535, 2
      %v561 = vstv %s532
      %v562 = vsel %vm560, %v561, 0.0
      %v563 = vstv %s556
      %v564 = vsel %vm559, %v563, %v562
      %v565 = vstv %s495
      %v566 = vsel %vm558, %v565, %v564
      %v567 = vadd.f32 %v557, %v566
      %568 = vst [vmem:[%s226] sm:$0xff] %v567
      %p569 = scmp.lt.s32.totalorder %s18, 1
      %s570 = scalar_select %p569, %s18, 1
      %s571 = smul.addr %s570, 8
      %s572 = scalar_lea.vmem %s3, %s571
      // Predicated region
      $region37: #{loss.5} parent=31 // pred_check
        %p573 = pneg %p122
      $region38: #{loss.5} parent=31 // pred_check_branch
        %575 = sbr.rel (%p573) target = $region40
      $region39: #{loss.5} parent=31 // pred_region
        _
      $region40: #{loss.5} parent=31 // pred_fallthru
        _
    $region32: #{loss.5} parent=5 // pred_fallthru
      _
    %p576 = scmp.le.s32.totalorder 2, %s9
    // Predicated region
    $region41: #{loss.5} parent=5 // pred_check
      %p577 = pneg %p576
    $region42: #{loss.5} parent=5 // pred_check_branch
      %579 = sbr.rel (%p577) target = $region44
    $region43: #{loss.5} parent=5 // pred_region
      %s580 = ssub.s32 %s9, 2
      // Predicated region
      $region45: #{loss.5} parent=43 // pred_check
        %p581 = pneg %p128
      $region46: #{loss.5} parent=43 // pred_check_branch
        %583 = sbr.rel (%p581) target = $region48
      $region47: #{loss.5} parent=43 // pred_region
        %p584 = scmp.lt.s32.totalorder %s20, 1
        %s585 = scalar_select %p584, %s20, 1
        %s586 = smul.addr %s585, 8
        %s587 = scalar_lea.vmem %s3, %s586
      $region48: #{loss.5} parent=43 // pred_fallthru
        _
    $region44: #{loss.5} parent=5 // pred_fallthru
      _
  $region6: #{loss.5} parent=0 // loop_footer
    %s13 = sadd.s32 1, %s9
  $region7: #{loss.5} parent=0 // loop_footer_branch
    %8 = sbr.rel target = $region3
  $region8: #{loss.5} parent=0 // loop_exit
    _

</llo_original>
